<compile_context>
chip_gen: v6e
topology: v6e:2x2x1
jax: 0.10.0
libtpu: 0.0.40
codegen_flags: <defaults>
</compile_context>

<pallas_src>
import jax
import jax.numpy as jnp
from jax.experimental import pallas as pl
from jax.experimental.pallas import tpu as pltpu


# ReLU pattern of the original 8 linear layers (matches the nn.Sequential).
_RELU_AFTER_8 = (True, True, True, False, True, True, True, False)
# ReLU pattern after fusing layers 3 & 4 (the un-activated bottleneck pair)
# into a single 16x16 linear: 7 effective layers.
_RELU_AFTER_FUSED = (True, True, True, True, True, True, False)


def _round_up(n, m):
    return ((n + m - 1) // m) * m


def _cdiv(a, b):
    return -(-a // b)


def _autoencoder_kernel(x_ref, *refs):
    """refs = (w1, b1, ..., w7, b7, out_ref).

    x_ref:  (D, TB) bf16  (feature-major batch tile)
    w_i:    (out, in) bf16 (PyTorch layout)
    b_i:    (out, 1)  f32
    out:    (D, TB)  f32
    """
    out_ref = refs[-1]
    params = refs[:-1]

    h = x_ref[...]                                        # (D, TB) bf16
    n_layers = len(params) // 2
    for i in range(n_layers):
        w = params[2 * i][...]                            # (out, in) bf16
        b = params[2 * i + 1][...]                        # (out, 1)  f32
        y = jnp.dot(w, h, preferred_element_type=jnp.float32) + b
        if _RELU_AFTER_FUSED[i]:
            y = jnp.maximum(y, 0.0)
        # Keep f32 for the final store; feed bf16 to the next MXU pass.
        h = y if i + 1 == n_layers else y.astype(jnp.bfloat16)

    out_ref[...] = h.astype(out_ref.dtype)


def init_autoencoder_params(input_dim, key):
    """nn.Linear-style init: W (out,in), b (out,) ~ U(-1/sqrt(in), 1/sqrt(in))."""
    dims = [input_dim, 64, 32, 16, 8, 16, 32, 64, input_dim]
    params = []
    for i in range(8):
        fan_in, fan_out = dims[i], dims[i + 1]
        key, kw, kb = jax.random.split(key, 3)
        bound = 1.0 / float(fan_in) ** 0.5
        w = jax.random.uniform(kw, (fan_out, fan_in), jnp.float32, -bound, bound)
        b = jax.random.uniform(kb, (fan_out,), jnp.float32, -bound, bound)
        params.append((w, b))
    return params


def _fuse_bottleneck(params):
    """Fuse Linear(16,8) -> Linear(8,16) (no ReLU between) into one 16x16 layer."""
    w4, b4 = params[3]                # (8, 16), (8,)
    w5, b5 = params[4]                # (16, 8), (16,)
    w45 = w5 @ w4                     # (16, 16)
    b45 = w5 @ b4 + b5                # (16,)
    return list(params[:3]) + [(w45, b45)] + list(params[5:])


def autoencoder_forward(x, params, *, block_cols=2048):
    """x: (B, D) float32. Returns (B, D) float32 reconstruction."""
    B, D = x.shape

    fused = _fuse_bottleneck(params)  # 7 layers: (out,in) W, (out,) b, all f32

    # Batch-column tile: multiple of 128 (lane dim), capped at block_cols.
    # Ensure >=2 grid steps when B > 128 so v7x can shard across both TCs,
    # and pick the tile from cdiv(B, nsteps) so padding stays < one tile.
    nsteps = max(1, _cdiv(B, block_cols))
    if nsteps == 1 and B > 128:
        nsteps = 2
    tb = min(block_cols, _round_up(_cdiv(B, nsteps), 128))
    b_pad = _round_up(B, tb)
    grid = (b_pad // tb,)

    # Feature-major bf16 input slab: one wrapper transpose + pad + cast pass.
    xt = jnp.transpose(x).astype(jnp.bfloat16)            # (D, B)
    if b_pad != B:
        xt = jnp.pad(xt, ((0, 0), (0, b_pad - B)))

    flat = []
    for w, b in fused:
        flat.append(w.astype(jnp.bfloat16))                # (out, in) bf16
        flat.append(b.reshape(-1, 1).astype(jnp.float32))  # (out, 1)  f32

    x_spec = pl.BlockSpec((D, tb), lambda i: (0, i))
    out_spec = pl.BlockSpec((D, tb), lambda i: (0, i))
    # Full-shape blocks with constant index_map -> fetched once, VMEM-resident.
    param_specs = [pl.BlockSpec(a.shape, lambda i: (0, 0)) for a in flat]

    # Advisory cost estimate for XLA scheduling.
    dims_f = [D, 64, 32, 16, 16, 32, 64, D]
    flops = 2 * b_pad * sum(dims_f[i] * dims_f[i + 1] for i in range(7))
    param_bytes = sum(int(a.size) * a.dtype.itemsize for a in flat)
    bytes_accessed = b_pad * D * 2 + b_pad * D * 4 + param_bytes
    cost = pl.CostEstimate(
        flops=flops, transcendentals=0, bytes_accessed=bytes_accessed)

    out_t = pl.pallas_call(
        _autoencoder_kernel,
        out_shape=jax.ShapeDtypeStruct((D, b_pad), jnp.float32),
        grid=grid,
        in_specs=[x_spec] + param_specs,
        out_specs=out_spec,
        compiler_params=pltpu.CompilerParams(
            dimension_semantics=("parallel",)),
        cost_estimate=cost,
    )(xt, *flat)

    return jnp.transpose(out_t[:, :B])                     # (B, D) f32


def autoencoder_reference(x, params):
    """Pure-JAX f32 reference of the original 8-layer module (PyTorch layout)."""
    h = x
    for i, (w, b) in enumerate(params):
        h = h @ w.T + b
        if _RELU_AFTER_8[i]:
            h = jnp.maximum(h, 0.0)
    return h


if __name__ == "__main__":
    # B not a multiple of the tile -> exercises padding and a 2-step grid.
    B, D = 200, 32

    key = jax.random.PRNGKey(0)
    key, kx = jax.random.split(key)
    x = jax.random.normal(kx, (B, D), jnp.float32)

    params = init_autoencoder_params(D, key)

    out = autoencoder_forward(x, params)
    out = jax.block_until_ready(out)

    ref = autoencoder_reference(x, params)
    assert out.shape == (B, D) and out.dtype == jnp.float32
    # bf16 MXU operands (f32 accumulation) -> ~1% deviation vs exact f32.
    assert jnp.allclose(out, ref, atol=3e-2, rtol=3e-2), "mismatch vs reference"

    print("KERNEL_OK")
</pallas_src>

<mosaic_0001>
module attributes {stable_mosaic.version = 11 : i64} {
  func.func @_autoencoder_kernel(%arg0: i32, %arg1: memref<32x128xbf16, #tpu.memory_space<vmem>>, %arg2: memref<64x32xbf16, #tpu.memory_space<vmem>>, %arg3: memref<64x1xf32, #tpu.memory_space<vmem>>, %arg4: memref<32x64xbf16, #tpu.memory_space<vmem>>, %arg5: memref<32x1xf32, #tpu.memory_space<vmem>>, %arg6: memref<16x32xbf16, #tpu.memory_space<vmem>>, %arg7: memref<16x1xf32, #tpu.memory_space<vmem>>, %arg8: memref<16x16xbf16, #tpu.memory_space<vmem>>, %arg9: memref<16x1xf32, #tpu.memory_space<vmem>>, %arg10: memref<32x16xbf16, #tpu.memory_space<vmem>>, %arg11: memref<32x1xf32, #tpu.memory_space<vmem>>, %arg12: memref<64x32xbf16, #tpu.memory_space<vmem>>, %arg13: memref<64x1xf32, #tpu.memory_space<vmem>>, %arg14: memref<32x64xbf16, #tpu.memory_space<vmem>>, %arg15: memref<32x1xf32, #tpu.memory_space<vmem>>, %arg16: memref<32x128xf32, #tpu.memory_space<vmem>>) attributes {dimension_semantics = [#tpu.dimension_semantics<parallel>], iteration_bounds = array<i64: 2>, scalar_prefetch = 0 : i64, scratch_operands = 0 : i64, tpu.core_type = #tpu.core_type<tc>, window_params = [{transform_indices = @transform_0, window_bounds = array<i64: 32, 128>}, {pipeline_mode = #tpu.pipeline_mode<synchronous>, transform_indices = @transform_1, window_bounds = array<i64: 64, 32>}, {pipeline_mode = #tpu.pipeline_mode<synchronous>, transform_indices = @transform_2, window_bounds = array<i64: 64, 1>}, {pipeline_mode = #tpu.pipeline_mode<synchronous>, transform_indices = @transform_3, window_bounds = array<i64: 32, 64>}, {pipeline_mode = #tpu.pipeline_mode<synchronous>, transform_indices = @transform_4, window_bounds = array<i64: 32, 1>}, {pipeline_mode = #tpu.pipeline_mode<synchronous>, transform_indices = @transform_5, window_bounds = array<i64: 16, 32>}, {pipeline_mode = #tpu.pipeline_mode<synchronous>, transform_indices = @transform_6, window_bounds = array<i64: 16, 1>}, {pipeline_mode = #tpu.pipeline_mode<synchronous>, transform_indices = @transform_7, window_bounds = array<i64: 16, 16>}, {pipeline_mode = #tpu.pipeline_mode<synchronous>, transform_indices = @transform_8, window_bounds = array<i64: 16, 1>}, {pipeline_mode = #tpu.pipeline_mode<synchronous>, transform_indices = @transform_9, window_bounds = array<i64: 32, 16>}, {pipeline_mode = #tpu.pipeline_mode<synchronous>, transform_indices = @transform_10, window_bounds = array<i64: 32, 1>}, {pipeline_mode = #tpu.pipeline_mode<synchronous>, transform_indices = @transform_11, window_bounds = array<i64: 64, 32>}, {pipeline_mode = #tpu.pipeline_mode<synchronous>, transform_indices = @transform_12, window_bounds = array<i64: 64, 1>}, {pipeline_mode = #tpu.pipeline_mode<synchronous>, transform_indices = @transform_13, window_bounds = array<i64: 32, 64>}, {pipeline_mode = #tpu.pipeline_mode<synchronous>, transform_indices = @transform_14, window_bounds = array<i64: 32, 1>}, {transform_indices = @transform_15, window_bounds = array<i64: 32, 128>}]} {
    %c0 = arith.constant 0 : index
    %c0_0 = arith.constant 0 : index
    %0 = vector.load %arg1[%c0, %c0_0] : memref<32x128xbf16, #tpu.memory_space<vmem>>, vector<32x128xbf16>
    %c0_1 = arith.constant 0 : index
    %c0_2 = arith.constant 0 : index
    %1 = vector.load %arg2[%c0_1, %c0_2] : memref<64x32xbf16, #tpu.memory_space<vmem>>, vector<64x32xbf16>
    %c0_3 = arith.constant 0 : index
    %c0_4 = arith.constant 0 : index
    %2 = vector.load %arg3[%c0_3, %c0_4] : memref<64x1xf32, #tpu.memory_space<vmem>>, vector<64x1xf32>
    %cst = arith.constant dense<0.000000e+00> : vector<64x128xf32>
    %3 = tpu.matmul %1, %0, %cst {dimension_numbers = #tpu.dot_dimension_numbers<[1], [0], [0], [1], [0, 0, 1, 1], [], []>} : vector<64x32xbf16>, vector<32x128xbf16>, vector<64x128xf32> -> vector<64x128xf32>
    %4 = vector.broadcast %2 : vector<64x1xf32> to vector<64x128xf32>
    %5 = arith.addf %3, %4 : vector<64x128xf32>
    %cst_5 = arith.constant 0.000000e+00 : f32
    %6 = vector.broadcast %cst_5 : f32 to vector<64x128xf32>
    %7 = arith.maximumf %5, %6 : vector<64x128xf32>
    %8 = arith.truncf %7 : vector<64x128xf32> to vector<64x128xbf16>
    %c0_6 = arith.constant 0 : index
    %c0_7 = arith.constant 0 : index
    %9 = vector.load %arg4[%c0_6, %c0_7] : memref<32x64xbf16, #tpu.memory_space<vmem>>, vector<32x64xbf16>
    %c0_8 = arith.constant 0 : index
    %c0_9 = arith.constant 0 : index
    %10 = vector.load %arg5[%c0_8, %c0_9] : memref<32x1xf32, #tpu.memory_space<vmem>>, vector<32x1xf32>
    %cst_10 = arith.constant dense<0.000000e+00> : vector<32x128xf32>
    %11 = tpu.matmul %9, %8, %cst_10 {dimension_numbers = #tpu.dot_dimension_numbers<[1], [0], [0], [1], [0, 0, 1, 1], [], []>} : vector<32x64xbf16>, vector<64x128xbf16>, vector<32x128xf32> -> vector<32x128xf32>
    %12 = vector.broadcast %10 : vector<32x1xf32> to vector<32x128xf32>
    %13 = arith.addf %11, %12 : vector<32x128xf32>
    %cst_11 = arith.constant 0.000000e+00 : f32
    %14 = vector.broadcast %cst_11 : f32 to vector<32x128xf32>
    %15 = arith.maximumf %13, %14 : vector<32x128xf32>
    %16 = arith.truncf %15 : vector<32x128xf32> to vector<32x128xbf16>
    %c0_12 = arith.constant 0 : index
    %c0_13 = arith.constant 0 : index
    %17 = vector.load %arg6[%c0_12, %c0_13] : memref<16x32xbf16, #tpu.memory_space<vmem>>, vector<16x32xbf16>
    %c0_14 = arith.constant 0 : index
    %c0_15 = arith.constant 0 : index
    %18 = vector.load %arg7[%c0_14, %c0_15] : memref<16x1xf32, #tpu.memory_space<vmem>>, vector<16x1xf32>
    %cst_16 = arith.constant dense<0.000000e+00> : vector<16x128xf32>
    %19 = tpu.matmul %17, %16, %cst_16 {dimension_numbers = #tpu.dot_dimension_numbers<[1], [0], [0], [1], [0, 0, 1, 1], [], []>} : vector<16x32xbf16>, vector<32x128xbf16>, vector<16x128xf32> -> vector<16x128xf32>
    %20 = vector.broadcast %18 : vector<16x1xf32> to vector<16x128xf32>
    %21 = arith.addf %19, %20 : vector<16x128xf32>
    %cst_17 = arith.constant 0.000000e+00 : f32
    %22 = vector.broadcast %cst_17 : f32 to vector<16x128xf32>
    %23 = arith.maximumf %21, %22 : vector<16x128xf32>
    %24 = arith.truncf %23 : vector<16x128xf32> to vector<16x128xbf16>
    %c0_18 = arith.constant 0 : index
    %c0_19 = arith.constant 0 : index
    %25 = vector.load %arg8[%c0_18, %c0_19] : memref<16x16xbf16, #tpu.memory_space<vmem>>, vector<16x16xbf16>
    %c0_20 = arith.constant 0 : index
    %c0_21 = arith.constant 0 : index
    %26 = vector.load %arg9[%c0_20, %c0_21] : memref<16x1xf32, #tpu.memory_space<vmem>>, vector<16x1xf32>
    %cst_22 = arith.constant dense<0.000000e+00> : vector<16x128xf32>
    %27 = tpu.matmul %25, %24, %cst_22 {dimension_numbers = #tpu.dot_dimension_numbers<[1], [0], [0], [1], [0, 0, 1, 1], [], []>} : vector<16x16xbf16>, vector<16x128xbf16>, vector<16x128xf32> -> vector<16x128xf32>
    %28 = vector.broadcast %26 : vector<16x1xf32> to vector<16x128xf32>
    %29 = arith.addf %27, %28 : vector<16x128xf32>
    %cst_23 = arith.constant 0.000000e+00 : f32
    %30 = vector.broadcast %cst_23 : f32 to vector<16x128xf32>
    %31 = arith.maximumf %29, %30 : vector<16x128xf32>
    %32 = arith.truncf %31 : vector<16x128xf32> to vector<16x128xbf16>
    %c0_24 = arith.constant 0 : index
    %c0_25 = arith.constant 0 : index
    %33 = vector.load %arg10[%c0_24, %c0_25] : memref<32x16xbf16, #tpu.memory_space<vmem>>, vector<32x16xbf16>
    %c0_26 = arith.constant 0 : index
    %c0_27 = arith.constant 0 : index
    %34 = vector.load %arg11[%c0_26, %c0_27] : memref<32x1xf32, #tpu.memory_space<vmem>>, vector<32x1xf32>
    %cst_28 = arith.constant dense<0.000000e+00> : vector<32x128xf32>
    %35 = tpu.matmul %33, %32, %cst_28 {dimension_numbers = #tpu.dot_dimension_numbers<[1], [0], [0], [1], [0, 0, 1, 1], [], []>} : vector<32x16xbf16>, vector<16x128xbf16>, vector<32x128xf32> -> vector<32x128xf32>
    %36 = vector.broadcast %34 : vector<32x1xf32> to vector<32x128xf32>
    %37 = arith.addf %35, %36 : vector<32x128xf32>
    %cst_29 = arith.constant 0.000000e+00 : f32
    %38 = vector.broadcast %cst_29 : f32 to vector<32x128xf32>
    %39 = arith.maximumf %37, %38 : vector<32x128xf32>
    %40 = arith.truncf %39 : vector<32x128xf32> to vector<32x128xbf16>
    %c0_30 = arith.constant 0 : index
    %c0_31 = arith.constant 0 : index
    %41 = vector.load %arg12[%c0_30, %c0_31] : memref<64x32xbf16, #tpu.memory_space<vmem>>, vector<64x32xbf16>
    %c0_32 = arith.constant 0 : index
    %c0_33 = arith.constant 0 : index
    %42 = vector.load %arg13[%c0_32, %c0_33] : memref<64x1xf32, #tpu.memory_space<vmem>>, vector<64x1xf32>
    %cst_34 = arith.constant dense<0.000000e+00> : vector<64x128xf32>
    %43 = tpu.matmul %41, %40, %cst_34 {dimension_numbers = #tpu.dot_dimension_numbers<[1], [0], [0], [1], [0, 0, 1, 1], [], []>} : vector<64x32xbf16>, vector<32x128xbf16>, vector<64x128xf32> -> vector<64x128xf32>
    %44 = vector.broadcast %42 : vector<64x1xf32> to vector<64x128xf32>
    %45 = arith.addf %43, %44 : vector<64x128xf32>
    %cst_35 = arith.constant 0.000000e+00 : f32
    %46 = vector.broadcast %cst_35 : f32 to vector<64x128xf32>
    %47 = arith.maximumf %45, %46 : vector<64x128xf32>
    %48 = arith.truncf %47 : vector<64x128xf32> to vector<64x128xbf16>
    %c0_36 = arith.constant 0 : index
    %c0_37 = arith.constant 0 : index
    %49 = vector.load %arg14[%c0_36, %c0_37] : memref<32x64xbf16, #tpu.memory_space<vmem>>, vector<32x64xbf16>
    %c0_38 = arith.constant 0 : index
    %c0_39 = arith.constant 0 : index
    %50 = vector.load %arg15[%c0_38, %c0_39] : memref<32x1xf32, #tpu.memory_space<vmem>>, vector<32x1xf32>
    %cst_40 = arith.constant dense<0.000000e+00> : vector<32x128xf32>
    %51 = tpu.matmul %49, %48, %cst_40 {dimension_numbers = #tpu.dot_dimension_numbers<[1], [0], [0], [1], [0, 0, 1, 1], [], []>} : vector<32x64xbf16>, vector<64x128xbf16>, vector<32x128xf32> -> vector<32x128xf32>
    %52 = vector.broadcast %50 : vector<32x1xf32> to vector<32x128xf32>
    %53 = arith.addf %51, %52 : vector<32x128xf32>
    %c0_41 = arith.constant 0 : index
    %c0_42 = arith.constant 0 : index
    %54 = vector.load %arg16[%c0_41, %c0_42] : memref<32x128xf32, #tpu.memory_space<vmem>>, vector<32x128xf32>
    tpu.vector_store %arg16[%c0_41, %c0_42], %53 {strides = array<i32>} : memref<32x128xf32, #tpu.memory_space<vmem>>, vector<32x128xf32>,
    return
  }
  func.func @transform_0(%arg0: i32) -> (i32, i32) {
    %c0_i32 = arith.constant 0 : i32
    %c0_i32_0 = arith.constant 0 : i32
    return %c0_i32, %arg0 : i32, i32
  }
  func.func @transform_1(%arg0: i32) -> (i32, i32) {
    %c0_i32 = arith.constant 0 : i32
    %c0_i32_0 = arith.constant 0 : i32
    %c0_i32_1 = arith.constant 0 : i32
    return %c0_i32, %c0_i32_0 : i32, i32
  }
  func.func @transform_2(%arg0: i32) -> (i32, i32) {
    %c0_i32 = arith.constant 0 : i32
    %c0_i32_0 = arith.constant 0 : i32
    %c0_i32_1 = arith.constant 0 : i32
    return %c0_i32, %c0_i32_0 : i32, i32
  }
  func.func @transform_3(%arg0: i32) -> (i32, i32) {
    %c0_i32 = arith.constant 0 : i32
    %c0_i32_0 = arith.constant 0 : i32
    %c0_i32_1 = arith.constant 0 : i32
    return %c0_i32, %c0_i32_0 : i32, i32
  }
  func.func @transform_4(%arg0: i32) -> (i32, i32) {
    %c0_i32 = arith.constant 0 : i32
    %c0_i32_0 = arith.constant 0 : i32
    %c0_i32_1 = arith.constant 0 : i32
    return %c0_i32, %c0_i32_0 : i32, i32
  }
  func.func @transform_5(%arg0: i32) -> (i32, i32) {
    %c0_i32 = arith.constant 0 : i32
    %c0_i32_0 = arith.constant 0 : i32
    %c0_i32_1 = arith.constant 0 : i32
    return %c0_i32, %c0_i32_0 : i32, i32
  }
  func.func @transform_6(%arg0: i32) -> (i32, i32) {
    %c0_i32 = arith.constant 0 : i32
    %c0_i32_0 = arith.constant 0 : i32
    %c0_i32_1 = arith.constant 0 : i32
    return %c0_i32, %c0_i32_0 : i32, i32
  }
  func.func @transform_7(%arg0: i32) -> (i32, i32) {
    %c0_i32 = arith.constant 0 : i32
    %c0_i32_0 = arith.constant 0 : i32
    %c0_i32_1 = arith.constant 0 : i32
    return %c0_i32, %c0_i32_0 : i32, i32
  }
  func.func @transform_8(%arg0: i32) -> (i32, i32) {
    %c0_i32 = arith.constant 0 : i32
    %c0_i32_0 = arith.constant 0 : i32
    %c0_i32_1 = arith.constant 0 : i32
    return %c0_i32, %c0_i32_0 : i32, i32
  }
  func.func @transform_9(%arg0: i32) -> (i32, i32) {
    %c0_i32 = arith.constant 0 : i32
    %c0_i32_0 = arith.constant 0 : i32
    %c0_i32_1 = arith.constant 0 : i32
    return %c0_i32, %c0_i32_0 : i32, i32
  }
  func.func @transform_10(%arg0: i32) -> (i32, i32) {
    %c0_i32 = arith.constant 0 : i32
    %c0_i32_0 = arith.constant 0 : i32
    %c0_i32_1 = arith.constant 0 : i32
    return %c0_i32, %c0_i32_0 : i32, i32
  }
  func.func @transform_11(%arg0: i32) -> (i32, i32) {
    %c0_i32 = arith.constant 0 : i32
    %c0_i32_0 = arith.constant 0 : i32
    %c0_i32_1 = arith.constant 0 : i32
    return %c0_i32, %c0_i32_0 : i32, i32
  }
  func.func @transform_12(%arg0: i32) -> (i32, i32) {
    %c0_i32 = arith.constant 0 : i32
    %c0_i32_0 = arith.constant 0 : i32
    %c0_i32_1 = arith.constant 0 : i32
    return %c0_i32, %c0_i32_0 : i32, i32
  }
  func.func @transform_13(%arg0: i32) -> (i32, i32) {
    %c0_i32 = arith.constant 0 : i32
    %c0_i32_0 = arith.constant 0 : i32
    %c0_i32_1 = arith.constant 0 : i32
    return %c0_i32, %c0_i32_0 : i32, i32
  }
  func.func @transform_14(%arg0: i32) -> (i32, i32) {
    %c0_i32 = arith.constant 0 : i32
    %c0_i32_0 = arith.constant 0 : i32
    %c0_i32_1 = arith.constant 0 : i32
    return %c0_i32, %c0_i32_0 : i32, i32
  }
  func.func @transform_15(%arg0: i32) -> (i32, i32) {
    %c0_i32 = arith.constant 0 : i32
    %c0_i32_0 = arith.constant 0 : i32
    return %c0_i32, %arg0 : i32, i32
  }
}

</mosaic_0001>

<llo_original>
// kernel: tpu_custom_call.1
$region0: #{tpu_custom_call.1}
  #allocation0 [shape = 'u32[]', space=smem, size = 0x4, offset = 0x4, fixed_abs, tag = 'smem constant byte address 0x4 - core index']
  #allocation1 [shape = 'u32[144,128]{1,0:T(1,128)}', space=vmem, size = 0x12000, scoped, tag = 'internal scratch']
  %s0 = inlined_call_operand.vmem [shape: bf16[32,256], index: 0, kind: input, shape index: {}]
  %s1 = inlined_call_operand.vmem [shape: bf16[64,32], index: 1, kind: input, shape index: {}]
  %s2 = inlined_call_operand.vmem [shape: f32[64,1], index: 2, kind: input, shape index: {}]
  %s3 = inlined_call_operand.vmem [shape: bf16[32,64], index: 3, kind: input, shape index: {}]
  %s4 = inlined_call_operand.vmem [shape: f32[32,1], index: 4, kind: input, shape index: {}]
  %s5 = inlined_call_operand.vmem [shape: bf16[16,32], index: 5, kind: input, shape index: {}]
  %s6 = inlined_call_operand.vmem [shape: f32[16,1], index: 6, kind: input, shape index: {}]
  %s7 = inlined_call_operand.vmem [shape: bf16[16,16], index: 7, kind: input, shape index: {}]
  %s8 = inlined_call_operand.vmem [shape: f32[16,1], index: 8, kind: input, shape index: {}]
  %s9 = inlined_call_operand.vmem [shape: bf16[32,16], index: 9, kind: input, shape index: {}]
  %s10 = inlined_call_operand.vmem [shape: f32[32,1], index: 10, kind: input, shape index: {}]
  %s11 = inlined_call_operand.vmem [shape: bf16[64,32], index: 11, kind: input, shape index: {}]
  %s12 = inlined_call_operand.vmem [shape: f32[64,1], index: 12, kind: input, shape index: {}]
  %s13 = inlined_call_operand.vmem [shape: bf16[32,64], index: 13, kind: input, shape index: {}]
  %s14 = inlined_call_operand.vmem [shape: f32[32,1], index: 14, kind: input, shape index: {}]
  %s15 = inlined_call_operand.hbm [shape: f32[32,256], index: 15, kind: output, shape index: {}]
  %s16 = sld [smem:[#allocation0]]
  $region134: #{tpu_custom_call.1} parent=0
    _
  %s18 = ssub.s32 1, %s16
  %s19 = scalar_select 0, %s18, %s16
  $region1: #{tpu_custom_call.1} parent=0
    #allocation2 [shape = 'u8[16384]{0}', space=vmem, size = 0x4000, scoped, tag = 'input window, operand 0']
    #allocation3 [shape = 'u8[32768]{0}', space=vmem, size = 0x8000, scoped, tag = 'output window, operand 0']
    #allocation4 [shape = 's32[2]{0}', space=sflag, size = 0x8, scoped, tag = 'scoped memory for tpu_custom_call.1']
    %20 = vsyncpa [#allocation4], 0
    %s21 = scalar_lea.sflag [#allocation4], 1
    %22 = vsyncpa %s21, 0
    loop: start=0, step=1, limit=4
    $region2: #{tpu_custom_call.1} parent=1 // loop_pre_header
      _
    $region3: #{tpu_custom_call.1} parent=1 // loop_header
      %s24 = sphi 0, %s28
      %p25 = scmp.ge.s32.totalorder %s24, 4
      %s34 = sphi 0, %s36
      %s37 = sphi 0, %s34
      %s38 = sphi 0, %s37
      %s54 = sphi 0, %s38
      %s58 = sphi 0, %s58
      %s60 = sphi 0, %s58
      %s61 = sphi 0, %s60
      %s75 = sphi 0, %s61
      %s79 = sphi 0, %s79
      %s81 = sphi 0, %s79
      %s82 = sphi 0, %s81
      %s96 = sphi 0, %s82
      %s100 = sphi 0, %s100
      %s102 = sphi 0, %s100
      %s103 = sphi 0, %s102
      %s117 = sphi 0, %s103
      %s121 = sphi 0, %s121
      %s123 = sphi 0, %s121
      %s124 = sphi 0, %s123
      %s138 = sphi 0, %s124
      %s142 = sphi 0, %s142
      %s144 = sphi 0, %s142
      %s145 = sphi 0, %s144
      %s159 = sphi 0, %s145
      %s163 = sphi 0, %s163
      %s165 = sphi 0, %s163
      %s166 = sphi 0, %s165
      %s180 = sphi 0, %s166
      %s184 = sphi 0, %s184
      %s186 = sphi 0, %s184
      %s187 = sphi 0, %s186
      %s201 = sphi 0, %s187
      %s205 = sphi 0, %s205
      %s207 = sphi 0, %s205
      %s208 = sphi 0, %s207
      %s222 = sphi 0, %s208
      %s226 = sphi 0, %s226
      %s228 = sphi 0, %s226
      %s229 = sphi 0, %s228
      %s243 = sphi 0, %s229
      %s247 = sphi 0, %s247
      %s249 = sphi 0, %s247
      %s250 = sphi 0, %s249
      %s264 = sphi 0, %s250
      %s268 = sphi 0, %s268
      %s270 = sphi 0, %s268
      %s271 = sphi 0, %s270
      %s285 = sphi 0, %s271
      %s289 = sphi 0, %s289
      %s291 = sphi 0, %s289
      %s292 = sphi 0, %s291
      %s306 = sphi 0, %s292
      %s310 = sphi 0, %s310
      %s312 = sphi 0, %s310
      %s313 = sphi 0, %s312
      %s327 = sphi 0, %s313
      %s331 = sphi 0, %s331
      %s333 = sphi 0, %s331
      %s334 = sphi 0, %s333
      %s348 = sphi 0, %s334
      %s354 = sphi 0, %s356
      %s357 = sphi 0, %s354
      %s358 = sphi 0, %s357
      %s374 = sphi 0, %s358
    $region4: #{tpu_custom_call.1} parent=1 // loop_header_branch
      %27 = sbr.rel (%p25) target = $region8
    $region5: #{tpu_custom_call.1} parent=1 // loop_body
      %s29 = ssub.s32 %s24, 1
      %s30 = ssub.s32 %s24, 2
      %s31 = sadd.s32 %s24, 1
      %s32 = ssub.s32 %s24, %s31
      %p33 = scmp.eq.s32.totalorder %s32, 0
      %s35 = sadd.s32 %s34, 1
      %s36 = scalar_select %p33, %s34, %s35
      %p39 = pneg %p33
      %p40 = scmp.eq.s32.totalorder %s24, 1
      %p41 = por %p39, %p40
      %p42 = scmp.ne.s32.totalorder %s34, %s37
      %p43 = scmp.eq.s32.totalorder %s24, 0
      %p44 = por %p42, %p43
      %p45 = scmp.ne.s32.totalorder %s34, %s37
      %p46 = scmp.eq.s32.totalorder %s29, 1
      %p47 = por %p45, %p46
      %p48 = scmp.ne.s32.totalorder %s37, %s38
      %p49 = scmp.eq.s32.totalorder %s29, 0
      %p50 = por %p48, %p49
      %p51 = scmp.ne.s32.totalorder %s37, %s38
      %p52 = scmp.eq.s32.totalorder %s30, 1
      %p53 = por %p51, %p52
      %p55 = scmp.ne.s32.totalorder %s38, %s54
      %p56 = scmp.eq.s32.totalorder %s30, 0
      %p57 = por %p55, %p56
      %s59 = sadd.s32 %s58, 1
      %p62 = scmp.eq.s32.totalorder %s24, 1
      %p63 = scmp.ne.s32.totalorder %s58, %s60
      %p64 = scmp.eq.s32.totalorder %s24, 0
      %p65 = por %p63, %p64
      %p66 = scmp.ne.s32.totalorder %s58, %s60
      %p67 = scmp.eq.s32.totalorder %s29, 1
      %p68 = por %p66, %p67
      %p69 = scmp.ne.s32.totalorder %s60, %s61
      %p70 = scmp.eq.s32.totalorder %s29, 0
      %p71 = por %p69, %p70
      %p72 = scmp.ne.s32.totalorder %s60, %s61
      %p73 = scmp.eq.s32.totalorder %s30, 1
      %p74 = por %p72, %p73
      %p76 = scmp.ne.s32.totalorder %s61, %s75
      %p77 = scmp.eq.s32.totalorder %s30, 0
      %p78 = por %p76, %p77
      %s80 = sadd.s32 %s79, 1
      %p83 = scmp.eq.s32.totalorder %s24, 1
      %p84 = scmp.ne.s32.totalorder %s79, %s81
      %p85 = scmp.eq.s32.totalorder %s24, 0
      %p86 = por %p84, %p85
      %p87 = scmp.ne.s32.totalorder %s79, %s81
      %p88 = scmp.eq.s32.totalorder %s29, 1
      %p89 = por %p87, %p88
      %p90 = scmp.ne.s32.totalorder %s81, %s82
      %p91 = scmp.eq.s32.totalorder %s29, 0
      %p92 = por %p90, %p91
      %p93 = scmp.ne.s32.totalorder %s81, %s82
      %p94 = scmp.eq.s32.totalorder %s30, 1
      %p95 = por %p93, %p94
      %p97 = scmp.ne.s32.totalorder %s82, %s96
      %p98 = scmp.eq.s32.totalorder %s30, 0
      %p99 = por %p97, %p98
      %s101 = sadd.s32 %s100, 1
      %p104 = scmp.eq.s32.totalorder %s24, 1
      %p105 = scmp.ne.s32.totalorder %s100, %s102
      %p106 = scmp.eq.s32.totalorder %s24, 0
      %p107 = por %p105, %p106
      %p108 = scmp.ne.s32.totalorder %s100, %s102
      %p109 = scmp.eq.s32.totalorder %s29, 1
      %p110 = por %p108, %p109
      %p111 = scmp.ne.s32.totalorder %s102, %s103
      %p112 = scmp.eq.s32.totalorder %s29, 0
      %p113 = por %p111, %p112
      %p114 = scmp.ne.s32.totalorder %s102, %s103
      %p115 = scmp.eq.s32.totalorder %s30, 1
      %p116 = por %p114, %p115
      %p118 = scmp.ne.s32.totalorder %s103, %s117
      %p119 = scmp.eq.s32.totalorder %s30, 0
      %p120 = por %p118, %p119
      %s122 = sadd.s32 %s121, 1
      %p125 = scmp.eq.s32.totalorder %s24, 1
      %p126 = scmp.ne.s32.totalorder %s121, %s123
      %p127 = scmp.eq.s32.totalorder %s24, 0
      %p128 = por %p126, %p127
      %p129 = scmp.ne.s32.totalorder %s121, %s123
      %p130 = scmp.eq.s32.totalorder %s29, 1
      %p131 = por %p129, %p130
      %p132 = scmp.ne.s32.totalorder %s123, %s124
      %p133 = scmp.eq.s32.totalorder %s29, 0
      %p134 = por %p132, %p133
      %p135 = scmp.ne.s32.totalorder %s123, %s124
      %p136 = scmp.eq.s32.totalorder %s30, 1
      %p137 = por %p135, %p136
      %p139 = scmp.ne.s32.totalorder %s124, %s138
      %p140 = scmp.eq.s32.totalorder %s30, 0
      %p141 = por %p139, %p140
      %s143 = sadd.s32 %s142, 1
      %p146 = scmp.eq.s32.totalorder %s24, 1
      %p147 = scmp.ne.s32.totalorder %s142, %s144
      %p148 = scmp.eq.s32.totalorder %s24, 0
      %p149 = por %p147, %p148
      %p150 = scmp.ne.s32.totalorder %s142, %s144
      %p151 = scmp.eq.s32.totalorder %s29, 1
      %p152 = por %p150, %p151
      %p153 = scmp.ne.s32.totalorder %s144, %s145
      %p154 = scmp.eq.s32.totalorder %s29, 0
      %p155 = por %p153, %p154
      %p156 = scmp.ne.s32.totalorder %s144, %s145
      %p157 = scmp.eq.s32.totalorder %s30, 1
      %p158 = por %p156, %p157
      %p160 = scmp.ne.s32.totalorder %s145, %s159
      %p161 = scmp.eq.s32.totalorder %s30, 0
      %p162 = por %p160, %p161
      %s164 = sadd.s32 %s163, 1
      %p167 = scmp.eq.s32.totalorder %s24, 1
      %p168 = scmp.ne.s32.totalorder %s163, %s165
      %p169 = scmp.eq.s32.totalorder %s24, 0
      %p170 = por %p168, %p169
      %p171 = scmp.ne.s32.totalorder %s163, %s165
      %p172 = scmp.eq.s32.totalorder %s29, 1
      %p173 = por %p171, %p172
      %p174 = scmp.ne.s32.totalorder %s165, %s166
      %p175 = scmp.eq.s32.totalorder %s29, 0
      %p176 = por %p174, %p175
      %p177 = scmp.ne.s32.totalorder %s165, %s166
      %p178 = scmp.eq.s32.totalorder %s30, 1
      %p179 = por %p177, %p178
      %p181 = scmp.ne.s32.totalorder %s166, %s180
      %p182 = scmp.eq.s32.totalorder %s30, 0
      %p183 = por %p181, %p182
      %s185 = sadd.s32 %s184, 1
      %p188 = scmp.eq.s32.totalorder %s24, 1
      %p189 = scmp.ne.s32.totalorder %s184, %s186
      %p190 = scmp.eq.s32.totalorder %s24, 0
      %p191 = por %p189, %p190
      %p192 = scmp.ne.s32.totalorder %s184, %s186
      %p193 = scmp.eq.s32.totalorder %s29, 1
      %p194 = por %p192, %p193
      %p195 = scmp.ne.s32.totalorder %s186, %s187
      %p196 = scmp.eq.s32.totalorder %s29, 0
      %p197 = por %p195, %p196
      %p198 = scmp.ne.s32.totalorder %s186, %s187
      %p199 = scmp.eq.s32.totalorder %s30, 1
      %p200 = por %p198, %p199
      %p202 = scmp.ne.s32.totalorder %s187, %s201
      %p203 = scmp.eq.s32.totalorder %s30, 0
      %p204 = por %p202, %p203
      %s206 = sadd.s32 %s205, 1
      %p209 = scmp.eq.s32.totalorder %s24, 1
      %p210 = scmp.ne.s32.totalorder %s205, %s207
      %p211 = scmp.eq.s32.totalorder %s24, 0
      %p212 = por %p210, %p211
      %p213 = scmp.ne.s32.totalorder %s205, %s207
      %p214 = scmp.eq.s32.totalorder %s29, 1
      %p215 = por %p213, %p214
      %p216 = scmp.ne.s32.totalorder %s207, %s208
      %p217 = scmp.eq.s32.totalorder %s29, 0
      %p218 = por %p216, %p217
      %p219 = scmp.ne.s32.totalorder %s207, %s208
      %p220 = scmp.eq.s32.totalorder %s30, 1
      %p221 = por %p219, %p220
      %p223 = scmp.ne.s32.totalorder %s208, %s222
      %p224 = scmp.eq.s32.totalorder %s30, 0
      %p225 = por %p223, %p224
      %s227 = sadd.s32 %s226, 1
      %p230 = scmp.eq.s32.totalorder %s24, 1
      %p231 = scmp.ne.s32.totalorder %s226, %s228
      %p232 = scmp.eq.s32.totalorder %s24, 0
      %p233 = por %p231, %p232
      %p234 = scmp.ne.s32.totalorder %s226, %s228
      %p235 = scmp.eq.s32.totalorder %s29, 1
      %p236 = por %p234, %p235
      %p237 = scmp.ne.s32.totalorder %s228, %s229
      %p238 = scmp.eq.s32.totalorder %s29, 0
      %p239 = por %p237, %p238
      %p240 = scmp.ne.s32.totalorder %s228, %s229
      %p241 = scmp.eq.s32.totalorder %s30, 1
      %p242 = por %p240, %p241
      %p244 = scmp.ne.s32.totalorder %s229, %s243
      %p245 = scmp.eq.s32.totalorder %s30, 0
      %p246 = por %p244, %p245
      %s248 = sadd.s32 %s247, 1
      %p251 = scmp.eq.s32.totalorder %s24, 1
      %p252 = scmp.ne.s32.totalorder %s247, %s249
      %p253 = scmp.eq.s32.totalorder %s24, 0
      %p254 = por %p252, %p253
      %p255 = scmp.ne.s32.totalorder %s247, %s249
      %p256 = scmp.eq.s32.totalorder %s29, 1
      %p257 = por %p255, %p256
      %p258 = scmp.ne.s32.totalorder %s249, %s250
      %p259 = scmp.eq.s32.totalorder %s29, 0
      %p260 = por %p258, %p259
      %p261 = scmp.ne.s32.totalorder %s249, %s250
      %p262 = scmp.eq.s32.totalorder %s30, 1
      %p263 = por %p261, %p262
      %p265 = scmp.ne.s32.totalorder %s250, %s264
      %p266 = scmp.eq.s32.totalorder %s30, 0
      %p267 = por %p265, %p266
      %s269 = sadd.s32 %s268, 1
      %p272 = scmp.eq.s32.totalorder %s24, 1
      %p273 = scmp.ne.s32.totalorder %s268, %s270
      %p274 = scmp.eq.s32.totalorder %s24, 0
      %p275 = por %p273, %p274
      %p276 = scmp.ne.s32.totalorder %s268, %s270
      %p277 = scmp.eq.s32.totalorder %s29, 1
      %p278 = por %p276, %p277
      %p279 = scmp.ne.s32.totalorder %s270, %s271
      %p280 = scmp.eq.s32.totalorder %s29, 0
      %p281 = por %p279, %p280
      %p282 = scmp.ne.s32.totalorder %s270, %s271
      %p283 = scmp.eq.s32.totalorder %s30, 1
      %p284 = por %p282, %p283
      %p286 = scmp.ne.s32.totalorder %s271, %s285
      %p287 = scmp.eq.s32.totalorder %s30, 0
      %p288 = por %p286, %p287
      %s290 = sadd.s32 %s289, 1
      %p293 = scmp.eq.s32.totalorder %s24, 1
      %p294 = scmp.ne.s32.totalorder %s289, %s291
      %p295 = scmp.eq.s32.totalorder %s24, 0
      %p296 = por %p294, %p295
      %p297 = scmp.ne.s32.totalorder %s289, %s291
      %p298 = scmp.eq.s32.totalorder %s29, 1
      %p299 = por %p297, %p298
      %p300 = scmp.ne.s32.totalorder %s291, %s292
      %p301 = scmp.eq.s32.totalorder %s29, 0
      %p302 = por %p300, %p301
      %p303 = scmp.ne.s32.totalorder %s291, %s292
      %p304 = scmp.eq.s32.totalorder %s30, 1
      %p305 = por %p303, %p304
      %p307 = scmp.ne.s32.totalorder %s292, %s306
      %p308 = scmp.eq.s32.totalorder %s30, 0
      %p309 = por %p307, %p308
      %s311 = sadd.s32 %s310, 1
      %p314 = scmp.eq.s32.totalorder %s24, 1
      %p315 = scmp.ne.s32.totalorder %s310, %s312
      %p316 = scmp.eq.s32.totalorder %s24, 0
      %p317 = por %p315, %p316
      %p318 = scmp.ne.s32.totalorder %s310, %s312
      %p319 = scmp.eq.s32.totalorder %s29, 1
      %p320 = por %p318, %p319
      %p321 = scmp.ne.s32.totalorder %s312, %s313
      %p322 = scmp.eq.s32.totalorder %s29, 0
      %p323 = por %p321, %p322
      %p324 = scmp.ne.s32.totalorder %s312, %s313
      %p325 = scmp.eq.s32.totalorder %s30, 1
      %p326 = por %p324, %p325
      %p328 = scmp.ne.s32.totalorder %s313, %s327
      %p329 = scmp.eq.s32.totalorder %s30, 0
      %p330 = por %p328, %p329
      %s332 = sadd.s32 %s331, 1
      %p335 = scmp.eq.s32.totalorder %s24, 1
      %p336 = scmp.ne.s32.totalorder %s331, %s333
      %p337 = scmp.eq.s32.totalorder %s24, 0
      %p338 = por %p336, %p337
      %p339 = scmp.ne.s32.totalorder %s331, %s333
      %p340 = scmp.eq.s32.totalorder %s29, 1
      %p341 = por %p339, %p340
      %p342 = scmp.ne.s32.totalorder %s333, %s334
      %p343 = scmp.eq.s32.totalorder %s29, 0
      %p344 = por %p342, %p343
      %p345 = scmp.ne.s32.totalorder %s333, %s334
      %p346 = scmp.eq.s32.totalorder %s30, 1
      %p347 = por %p345, %p346
      %p349 = scmp.ne.s32.totalorder %s334, %s348
      %p350 = scmp.eq.s32.totalorder %s30, 0
      %p351 = por %p349, %p350
      %s352 = ssub.s32 %s24, %s31
      %p353 = scmp.eq.s32.totalorder %s352, 0
      %s355 = sadd.s32 %s354, 1
      %s356 = scalar_select %p353, %s354, %s355
      %p359 = pneg %p353
      %p360 = scmp.eq.s32.totalorder %s24, 1
      %p361 = por %p359, %p360
      %p362 = scmp.ne.s32.totalorder %s354, %s357
      %p363 = scmp.eq.s32.totalorder %s24, 0
      %p364 = por %p362, %p363
      %p365 = scmp.ne.s32.totalorder %s354, %s357
      %p366 = scmp.eq.s32.totalorder %s29, 1
      %p367 = por %p365, %p366
      %p368 = scmp.ne.s32.totalorder %s357, %s358
      %p369 = scmp.eq.s32.totalorder %s29, 0
      %p370 = por %p368, %p369
      %p371 = scmp.ne.s32.totalorder %s357, %s358
      %p372 = scmp.eq.s32.totalorder %s30, 1
      %p373 = por %p371, %p372
      %p375 = scmp.ne.s32.totalorder %s358, %s374
      %p376 = scmp.eq.s32.totalorder %s30, 0
      %p377 = por %p375, %p376
      %p378 = scmp.le.s32.totalorder 1, %s24
      %p379 = scmp.lt.s32.totalorder %s24, 3
      %p380 = pnand %p378, %p379
      %p381 = pneg %p380
      // Predicated region
      $region9: #{tpu_custom_call.1} parent=5 // pred_check
        _
      $region10: #{tpu_custom_call.1} parent=5 // pred_check_branch
        %383 = sbr.rel (%p380) target = $region12
      $region11: #{tpu_custom_call.1} parent=5 // pred_region
        %s384 = ssub.s32 %s24, 1
        // Predicated region
        $region13: #{tpu_custom_call.1} parent=11 // pred_check
          %p385 = pneg %p71
        $region14: #{tpu_custom_call.1} parent=11 // pred_check_branch
          %387 = sbr.rel (%p385) target = $region16
        $region15: #{tpu_custom_call.1} parent=11 // pred_region
          _
        $region16: #{tpu_custom_call.1} parent=11 // pred_fallthru
          _
        // Predicated region
        $region17: #{tpu_custom_call.1} parent=11 // pred_check
          %p388 = pneg %p92
        $region18: #{tpu_custom_call.1} parent=11 // pred_check_branch
          %390 = sbr.rel (%p388) target = $region20
        $region19: #{tpu_custom_call.1} parent=11 // pred_region
          _
        $region20: #{tpu_custom_call.1} parent=11 // pred_fallthru
          _
        // Predicated region
        $region21: #{tpu_custom_call.1} parent=11 // pred_check
          %p391 = pneg %p113
        $region22: #{tpu_custom_call.1} parent=11 // pred_check_branch
          %393 = sbr.rel (%p391) target = $region24
        $region23: #{tpu_custom_call.1} parent=11 // pred_region
          _
        $region24: #{tpu_custom_call.1} parent=11 // pred_fallthru
          _
        // Predicated region
        $region25: #{tpu_custom_call.1} parent=11 // pred_check
          %p394 = pneg %p134
        $region26: #{tpu_custom_call.1} parent=11 // pred_check_branch
          %396 = sbr.rel (%p394) target = $region28
        $region27: #{tpu_custom_call.1} parent=11 // pred_region
          _
        $region28: #{tpu_custom_call.1} parent=11 // pred_fallthru
          _
        // Predicated region
        $region29: #{tpu_custom_call.1} parent=11 // pred_check
          %p397 = pneg %p155
        $region30: #{tpu_custom_call.1} parent=11 // pred_check_branch
          %399 = sbr.rel (%p397) target = $region32
        $region31: #{tpu_custom_call.1} parent=11 // pred_region
          _
        $region32: #{tpu_custom_call.1} parent=11 // pred_fallthru
          _
        // Predicated region
        $region33: #{tpu_custom_call.1} parent=11 // pred_check
          %p400 = pneg %p176
        $region34: #{tpu_custom_call.1} parent=11 // pred_check_branch
          %402 = sbr.rel (%p400) target = $region36
        $region35: #{tpu_custom_call.1} parent=11 // pred_region
          _
        $region36: #{tpu_custom_call.1} parent=11 // pred_fallthru
          _
        // Predicated region
        $region37: #{tpu_custom_call.1} parent=11 // pred_check
          %p403 = pneg %p197
        $region38: #{tpu_custom_call.1} parent=11 // pred_check_branch
          %405 = sbr.rel (%p403) target = $region40
        $region39: #{tpu_custom_call.1} parent=11 // pred_region
          _
        $region40: #{tpu_custom_call.1} parent=11 // pred_fallthru
          _
        // Predicated region
        $region41: #{tpu_custom_call.1} parent=11 // pred_check
          %p406 = pneg %p218
        $region42: #{tpu_custom_call.1} parent=11 // pred_check_branch
          %408 = sbr.rel (%p406) target = $region44
        $region43: #{tpu_custom_call.1} parent=11 // pred_region
          _
        $region44: #{tpu_custom_call.1} parent=11 // pred_fallthru
          _
        // Predicated region
        $region45: #{tpu_custom_call.1} parent=11 // pred_check
          %p409 = pneg %p239
        $region46: #{tpu_custom_call.1} parent=11 // pred_check_branch
          %411 = sbr.rel (%p409) target = $region48
        $region47: #{tpu_custom_call.1} parent=11 // pred_region
          _
        $region48: #{tpu_custom_call.1} parent=11 // pred_fallthru
          _
        // Predicated region
        $region49: #{tpu_custom_call.1} parent=11 // pred_check
          %p412 = pneg %p260
        $region50: #{tpu_custom_call.1} parent=11 // pred_check_branch
          %414 = sbr.rel (%p412) target = $region52
        $region51: #{tpu_custom_call.1} parent=11 // pred_region
          _
        $region52: #{tpu_custom_call.1} parent=11 // pred_fallthru
          _
        // Predicated region
        $region53: #{tpu_custom_call.1} parent=11 // pred_check
          %p415 = pneg %p281
        $region54: #{tpu_custom_call.1} parent=11 // pred_check_branch
          %417 = sbr.rel (%p415) target = $region56
        $region55: #{tpu_custom_call.1} parent=11 // pred_region
          _
        $region56: #{tpu_custom_call.1} parent=11 // pred_fallthru
          _
        // Predicated region
        $region57: #{tpu_custom_call.1} parent=11 // pred_check
          %p418 = pneg %p302
        $region58: #{tpu_custom_call.1} parent=11 // pred_check_branch
          %420 = sbr.rel (%p418) target = $region60
        $region59: #{tpu_custom_call.1} parent=11 // pred_region
          _
        $region60: #{tpu_custom_call.1} parent=11 // pred_fallthru
          _
        // Predicated region
        $region61: #{tpu_custom_call.1} parent=11 // pred_check
          %p421 = pneg %p323
        $region62: #{tpu_custom_call.1} parent=11 // pred_check_branch
          %423 = sbr.rel (%p421) target = $region64
        $region63: #{tpu_custom_call.1} parent=11 // pred_region
          _
        $region64: #{tpu_custom_call.1} parent=11 // pred_fallthru
          _
        // Predicated region
        $region65: #{tpu_custom_call.1} parent=11 // pred_check
          %p424 = pneg %p344
        $region66: #{tpu_custom_call.1} parent=11 // pred_check_branch
          %426 = sbr.rel (%p424) target = $region68
        $region67: #{tpu_custom_call.1} parent=11 // pred_region
          _
        $region68: #{tpu_custom_call.1} parent=11 // pred_fallthru
          _
      $region12: #{tpu_custom_call.1} parent=5 // pred_fallthru
        _
      %p427 = scmp.lt.s32.totalorder %s24, 2
      // Predicated region
      $region69: #{tpu_custom_call.1} parent=5 // pred_check
        %p428 = pneg %p427
      $region70: #{tpu_custom_call.1} parent=5 // pred_check_branch
        %430 = sbr.rel (%p428) target = $region72
      $region71: #{tpu_custom_call.1} parent=5 // pred_region
        // Predicated region
        $region73: #{tpu_custom_call.1} parent=71 // pred_check
          %p431 = pneg %p44
        $region74: #{tpu_custom_call.1} parent=71 // pred_check_branch
          %433 = sbr.rel (%p431) target = $region76
        $region75: #{tpu_custom_call.1} parent=71 // pred_region
          %s434 = sand.u32 %s34, 1
          %s435 = sand.u32 %s34, 1
          %s436 = smul.addr %s435, 16
          %s437 = scalar_lea.vmem [#allocation2], %s436
          %s438 = smul.addr %s24, 4
          %s439 = scalar_lea.vmem %s0, %s438
          // Predicated region
          $region77: #{tpu_custom_call.1} parent=75 // pred_check
            _
          $region78: #{tpu_custom_call.1} parent=75 // pred_check_branch
            %441 = sbr.rel (0) target = $region80
          $region79: #{tpu_custom_call.1} parent=75 // pred_region
            // Predicated region
            $region81: #{tpu_custom_call.1} parent=79 // pred_check
              _
            $region82: #{tpu_custom_call.1} parent=79 // pred_check_branch
              %443 = sbr.rel target = $region84
            $region83: #{tpu_custom_call.1} parent=79 // pred_region
              // Predicated region
              $region96: #{tpu_custom_call.1} parent=83 // pred_check
                _
              $region97: #{tpu_custom_call.1} parent=83 // pred_check_branch
                %465 = sbr.rel (0) target = $region99
              $region98: #{tpu_custom_call.1} parent=83 // pred_region
                loop: start=0, step=1, limit=1
                $region100: #{tpu_custom_call.1} parent=98 // loop_pre_header
                  _
                $region101: #{tpu_custom_call.1} parent=98 // loop_header
                  %s467 = sphi 0, %s471
                  %p468 = scmp.ge.s32.totalorder %s467, 1
                  %s472 = sphi %s439, %s439
                  %s473 = sphi %s437, %s437
                $region102: #{tpu_custom_call.1} parent=98 // loop_header_branch
                  %470 = sbr.rel (%p468) target = $region106
                $region103: #{tpu_custom_call.1} parent=98 // loop_body
                  _
                $region104: #{tpu_custom_call.1} parent=98 // loop_footer
                  %s471 = sadd.s32 1, %s467
                $region105: #{tpu_custom_call.1} parent=98 // loop_footer_branch
                  %466 = sbr.rel target = $region101
                $region106: #{tpu_custom_call.1} parent=98 // loop_exit
                  _
                %s475 = ssub.s32 16, 1
                loop: start=0, step=1, limit=1
                $region107: #{tpu_custom_call.1} parent=98 // loop_pre_header
                  _
                $region108: #{tpu_custom_call.1} parent=98 // loop_header
                  %s477 = sphi 0, %s481
                  %p478 = scmp.ge.s32.totalorder %s477, 1
                  %s482 = sphi %s439, %s439
                  %s483 = sphi %s437, %s437
                $region109: #{tpu_custom_call.1} parent=98 // loop_header_branch
                  %480 = sbr.rel (%p478) target = $region113
                $region110: #{tpu_custom_call.1} parent=98 // loop_body
                  %v484 = vld [vmem:[%s482] sm:%s475]
                  %485 = vst [vmem:[%s483] sm:%s475] %v484
                  %v486 = vld [vmem:[%s482 + $0x8] sm:%s475]
                  %487 = vst [vmem:[%s483 + $0x4] sm:%s475] %v486
                  %v488 = vld [vmem:[%s482 + $0x10] sm:%s475]
                  %489 = vst [vmem:[%s483 + $0x8] sm:%s475] %v488
                  %v490 = vld [vmem:[%s482 + $0x18] sm:%s475]
                  %491 = vst [vmem:[%s483 + $0xc] sm:%s475] %v490
                $region111: #{tpu_custom_call.1} parent=98 // loop_footer
                  %s481 = sadd.s32 1, %s477
                $region112: #{tpu_custom_call.1} parent=98 // loop_footer_branch
                  %476 = sbr.rel target = $region108
                $region113: #{tpu_custom_call.1} parent=98 // loop_exit
                  _
              $region99: #{tpu_custom_call.1} parent=83 // pred_fallthru
                _
            $region84: #{tpu_custom_call.1} parent=79 // pred_fallthru
              _
            // Predicated region
            $region85: #{tpu_custom_call.1} parent=79 // pred_check
              _
            $region86: #{tpu_custom_call.1} parent=79 // pred_check_branch
              %445 = sbr.rel (0) target = $region88
            $region87: #{tpu_custom_call.1} parent=79 // pred_region
              %s447 = ssub.s32 16, 1
              loop: start=0, step=1, limit=1
              $region89: #{tpu_custom_call.1} parent=87 // loop_pre_header
                _
              $region90: #{tpu_custom_call.1} parent=87 // loop_header
                %s449 = sphi 0, %s453
                %p450 = scmp.ge.s32.totalorder %s449, 1
                %s454 = sphi %s439, %s439
                %s455 = sphi %s437, %s437
              $region91: #{tpu_custom_call.1} parent=87 // loop_header_branch
                %452 = sbr.rel (%p450) target = $region95
              $region92: #{tpu_custom_call.1} parent=87 // loop_body
                %v456 = vld [vmem:[%s454] sm:%s447]
                %457 = vst [vmem:[%s455] sm:%s447] %v456
                %v458 = vld [vmem:[%s454 + $0x8] sm:%s447]
                %459 = vst [vmem:[%s455 + $0x4] sm:%s447] %v458
                %v460 = vld [vmem:[%s454 + $0x10] sm:%s447]
                %461 = vst [vmem:[%s455 + $0x8] sm:%s447] %v460
                %v462 = vld [vmem:[%s454 + $0x18] sm:%s447]
                %463 = vst [vmem:[%s455 + $0xc] sm:%s447] %v462
              $region93: #{tpu_custom_call.1} parent=87 // loop_footer
                %s453 = sadd.s32 1, %s449
              $region94: #{tpu_custom_call.1} parent=87 // loop_footer_branch
                %448 = sbr.rel target = $region90
              $region95: #{tpu_custom_call.1} parent=87 // loop_exit
                _
            $region88: #{tpu_custom_call.1} parent=79 // pred_fallthru
              _
          $region80: #{tpu_custom_call.1} parent=75 // pred_fallthru
            _
          %492 = vnop
        $region76: #{tpu_custom_call.1} parent=71 // pred_fallthru
          _
      $region72: #{tpu_custom_call.1} parent=5 // pred_fallthru
        _
      %p493 = scmp.le.s32.totalorder 1, %s24
      %p494 = scmp.lt.s32.totalorder %s24, 3
      %p495 = pnand %p493, %p494
      %p496 = pneg %p495
      // Predicated region
      $region114: #{tpu_custom_call.1} parent=5 // pred_check
        _
      $region115: #{tpu_custom_call.1} parent=5 // pred_check_branch
        %498 = sbr.rel (%p495) target = $region117
      $region116: #{tpu_custom_call.1} parent=5 // pred_region
        %s499 = ssub.s32 %s24, 1
        %s500 = sand.u32 %s37, 1
        %s501 = sand.u32 %s37, 1
        %s502 = smul.addr %s501, 16
        %s503 = scalar_lea.vmem [#allocation2], %s502
        // Predicated region
        $region118: #{tpu_custom_call.1} parent=116 // pred_check
          %p504 = pneg %p50
        $region119: #{tpu_custom_call.1} parent=116 // pred_check_branch
          %506 = sbr.rel (%p504) target = $region121
        $region120: #{tpu_custom_call.1} parent=116 // pred_region
          _
        $region121: #{tpu_custom_call.1} parent=116 // pred_fallthru
          _
        %s507 = sand.u32 %s37, 1
        %s508 = sand.u32 %s37, 1
        %s509 = smul.addr %s508, 16
        %s510 = scalar_lea.vmem [#allocation2], %s509
        %p511 = pneg %p50
        %p512 = pneg %p47
        %p513 = pneg %p71
        %p514 = pneg %p68
        %p515 = pneg %p92
        %p516 = pneg %p89
        %p517 = pneg %p113
        %p518 = pneg %p110
        %p519 = pneg %p134
        %p520 = pneg %p131
        %p521 = pneg %p155
        %p522 = pneg %p152
        %p523 = pneg %p176
        %p524 = pneg %p173
        %p525 = pneg %p197
        %p526 = pneg %p194
        %p527 = pneg %p218
        %p528 = pneg %p215
        %p529 = pneg %p239
        %p530 = pneg %p236
        %p531 = pneg %p260
        %p532 = pneg %p257
        %p533 = pneg %p281
        %p534 = pneg %p278
        %p535 = pneg %p302
        %p536 = pneg %p299
        %p537 = pneg %p323
        %p538 = pneg %p320
        %p539 = pneg %p344
        %p540 = pneg %p341
        %p541 = pneg %p370
        %p542 = pneg %p367
        %s543 = sand.u32 %s357, 1
        %s544 = scalar_lea.sflag [#allocation4], %s543
        %s545 = sand.u32 %s357, 1
        %s546 = smul.addr %s545, 32
        %s547 = scalar_lea.vmem [#allocation3], %s546
        %v549 = vld [vmem:[%s503] sm:$0xf]
        %v550 = vld [vmem:[%s503 + $0x4] sm:$0xf]
        %v551 = vld [vmem:[%s503 + $0x8] sm:$0xf]
        %v552 = vld [vmem:[%s503 + $0xc] sm:$0xf]
        %v553 = vld [vmem:[%s1] sm:$0xf]
        %v554 = vld [vmem:[%s1 + $0x4] sm:$0xf]
        %v555 = vld [vmem:[%s1 + $0x8] sm:$0xf]
        %v556 = vld [vmem:[%s1 + $0xc] sm:$0xf]
        %v557 = vld [vmem:[%s1 + $0x10] sm:$0xf]
        %v558 = vld [vmem:[%s1 + $0x14] sm:$0xf]
        %v559 = vld [vmem:[%s1 + $0x18] sm:$0xf]
        %v560 = vld [vmem:[%s1 + $0x1c] sm:$0xf]
        %v561 = vld [vmem:[%s2] sm:$0xff]
        %v562 = vld [vmem:[%s2 + $0x8] sm:$0xff]
        %v563 = vld [vmem:[%s2 + $0x10] sm:$0xff]
        %v564 = vld [vmem:[%s2 + $0x18] sm:$0xff]
        %v565 = vld [vmem:[%s2 + $0x20] sm:$0xff]
        %v566 = vld [vmem:[%s2 + $0x28] sm:$0xff]
        %v567 = vld [vmem:[%s2 + $0x30] sm:$0xff]
        %v568 = vld [vmem:[%s2 + $0x38] sm:$0xff]
        %570 = vset.pattern.permute.xlu0 0
        %571 = vperm.xlu0 %570, %v561
        %v572 = vpop.permute.xlu0 %571
        %575 = vset.pattern.permute.xlu0 0
        %576 = vperm.xlu0 %575, %v562
        %v577 = vpop.permute.xlu0 %576
        %580 = vset.pattern.permute.xlu0 0
        %581 = vperm.xlu0 %580, %v563
        %v582 = vpop.permute.xlu0 %581
        %585 = vset.pattern.permute.xlu0 0
        %586 = vperm.xlu0 %585, %v564
        %v587 = vpop.permute.xlu0 %586
        %590 = vset.pattern.permute.xlu0 0
        %591 = vperm.xlu0 %590, %v565
        %v592 = vpop.permute.xlu0 %591
        %595 = vset.pattern.permute.xlu0 0
        %596 = vperm.xlu0 %595, %v566
        %v597 = vpop.permute.xlu0 %596
        %600 = vset.pattern.permute.xlu0 0
        %601 = vperm.xlu0 %600, %v567
        %v602 = vpop.permute.xlu0 %601
        %605 = vset.pattern.permute.xlu0 0
        %606 = vperm.xlu0 %605, %v568
        %v607 = vpop.permute.xlu0 %606
        %v617 = vunpack.c.l.b16 %v553
        %v618 = vunpack.c.l.b16 %v554
        %v619 = vunpack.c.l.b16 %v555
        %v620 = vunpack.c.l.b16 %v556
        %v621 = vunpack.c.l.b16 %v557
        %v622 = vunpack.c.l.b16 %v558
        %v623 = vunpack.c.l.b16 %v559
        %v624 = vunpack.c.l.b16 %v560
        %v625 = vpack.c.b16 %v618, %v617
        %v626 = vpack.c.b16 %v620, %v619
        %v627 = vpack.c.b16 %v622, %v621
        %v628 = vpack.c.b16 %v624, %v623
        %v633 = vunpack.c.l.b16 %v549
        %v634 = vunpack.c.l.b16 %v550
        %v635 = vunpack.c.l.b16 %v551
        %v636 = vunpack.c.l.b16 %v552
        %v637 = vpack.c.b16 %v634, %v633
        %v638 = vpack.c.b16 %v636, %v635
        %vm641 = vcmask 261120
        %v643 = vsel %vm641, %v625, 0
        %v646 = vsel %vm641, %v626, 0
        %v649 = vsel %vm641, %v627, 0
        %v652 = vsel %vm641, %v628, 0
        %654 = vmatprep.subr.bf16.mxu0 0
        %655 = vmatpush1.bf16.msra.mxu0 0
        %656 = vmatprep.subr.bf16.mxu0 0
        %657 = vmatpush1.bf16.msra.mxu0 0
        %658 = vmatprep.subr.bf16.mxu0 0
        %659 = vmatpush1.bf16.msra.mxu0 0
        %660 = vmatprep.subr.bf16.mxu0 0
        %661 = vmatpush1.bf16.msra.mxu0 0
        %662 = vmatprep.subr.bf16.mxu0 0
        %663 = vmatpush1.bf16.msra.mxu0 0
        %664 = vmatprep.subr.bf16.mxu0 0
        %665 = vmatpush1.bf16.msra.mxu0 0
        %666 = vmatprep.subr.bf16.mxu0 0
        %667 = vmatpush1.bf16.msra.mxu0 %v638
        %668 = vmatprep.subr.bf16.mxu0 0
        %669 = vmatpush1.bf16.msra.mxu0 %v637
        %670 = vmatprep.subr.bf16.mxu0 0
        %671 = vmatpush2.bf16.msra.mxu0 0
        %672 = vmatprep.subr.bf16.mxu0 0
        %673 = vmatpush2.bf16.msra.mxu0 0
        %674 = vmatprep.subr.bf16.mxu0 0
        %675 = vmatpush2.bf16.msra.mxu0 0
        %676 = vmatprep.subr.bf16.mxu0 0
        %677 = vmatpush2.bf16.msra.mxu0 0
        %678 = vmatprep.subr.bf16.mxu0 0
        %679 = vmatpush2.bf16.msra.mxu0 0
        %680 = vmatprep.subr.bf16.mxu0 0
        %681 = vmatpush2.bf16.msra.mxu0 0
        %682 = vmatprep.subr.bf16.mxu0 0
        %683 = vmatpush2.bf16.msra.mxu0 0
        %684 = vmatprep.subr.bf16.mxu0 0
        %685 = vmatpush2.bf16.msra.mxu0 0
        %686 = vmatprep.mubr.bf16.mxu0 0
        %687 = vmatmul.mubr.bf16.gmra.mxu0 %v643
        %v688 = vpop.f32.mrf.mxu0
        %v689 = vadd.f32 %v572, %v688
        %v690 = vpop.f32.mrf.mxu0
        %v691 = vpop.f32.mrf.mxu0
        %v692 = vadd.f32 %v577, %v691
        %v693 = vpop.f32.mrf.mxu0
        %694 = vmatprep.mubr.bf16.mxu0 0
        %695 = vmatmul.mubr.bf16.gmra.mxu0 %v646
        %v696 = vpop.f32.mrf.mxu0
        %v697 = vadd.f32 %v582, %v696
        %v698 = vpop.f32.mrf.mxu0
        %v699 = vpop.f32.mrf.mxu0
        %v700 = vadd.f32 %v587, %v699
        %v701 = vpop.f32.mrf.mxu0
        %702 = vmatprep.mubr.bf16.mxu0 0
        %703 = vmatmul.mubr.bf16.gmra.mxu0 %v649
        %v704 = vpop.f32.mrf.mxu0
        %v705 = vadd.f32 %v592, %v704
        %v706 = vpop.f32.mrf.mxu0
        %v707 = vpop.f32.mrf.mxu0
        %v708 = vadd.f32 %v597, %v707
        %v709 = vpop.f32.mrf.mxu0
        %710 = vmatprep.mubr.bf16.mxu0 0
        %711 = vmatmul.mubr.bf16.gmra.mxu0 %v652
        %v712 = vpop.f32.mrf.mxu0
        %v713 = vadd.f32 %v602, %v712
        %v714 = vpop.f32.mrf.mxu0
        %v715 = vpop.f32.mrf.mxu0
        %v716 = vadd.f32 %v607, %v715
        %v717 = vpop.f32.mrf.mxu0
        %718 = vdwg.mxu0
        %v719 = vmax.f32 %v689, 0.0
        %v720 = vmax.f32 %v692, 0.0
        %v721 = vmax.f32 %v697, 0.0
        %v722 = vmax.f32 %v700, 0.0
        %v723 = vmax.f32 %v705, 0.0
        %v724 = vmax.f32 %v708, 0.0
        %v725 = vmax.f32 %v713, 0.0
        %v726 = vmax.f32 %v716, 0.0
        %v727 = vpack.c.bf16 %v720, %v719
        %v728 = vpack.c.bf16 %v722, %v721
        %v729 = vpack.c.bf16 %v724, %v723
        %v730 = vpack.c.bf16 %v726, %v725
        %v731 = vld [vmem:[%s3] sm:$0xf]
        %v732 = vld [vmem:[%s3 + $0x4] sm:$0xf]
        %v733 = vld [vmem:[%s3 + $0x8] sm:$0xf]
        %v734 = vld [vmem:[%s3 + $0xc] sm:$0xf]
        %v735 = vld [vmem:[%s4] sm:$0xff]
        %v736 = vld [vmem:[%s4 + $0x8] sm:$0xff]
        %v737 = vld [vmem:[%s4 + $0x10] sm:$0xff]
        %v738 = vld [vmem:[%s4 + $0x18] sm:$0xff]
        %740 = vset.pattern.permute.xlu0 0
        %741 = vperm.xlu0 %740, %v735
        %v742 = vpop.permute.xlu0 %741
        %745 = vset.pattern.permute.xlu0 0
        %746 = vperm.xlu0 %745, %v736
        %v747 = vpop.permute.xlu0 %746
        %750 = vset.pattern.permute.xlu0 0
        %751 = vperm.xlu0 %750, %v737
        %v752 = vpop.permute.xlu0 %751
        %755 = vset.pattern.permute.xlu0 0
        %756 = vperm.xlu0 %755, %v738
        %v757 = vpop.permute.xlu0 %756
        %v763 = vunpack.c.l.b16 %v731
        %v764 = vunpack.c.l.b16 %v732
        %v765 = vunpack.c.l.b16 %v733
        %v766 = vunpack.c.l.b16 %v734
        %v767 = vpack.c.b16 %v764, %v763
        %v768 = vpack.c.b16 %v766, %v765
        %vm769 = vcmask 523264
        %v771 = vsel %vm769, %v767, 0
        %v774 = vsel %vm769, %v768, 0
        %776 = vmatprep.subr.bf16.mxu0 0
        %777 = vmatpush1.bf16.msra.mxu0 0
        %778 = vmatprep.subr.bf16.mxu0 0
        %779 = vmatpush1.bf16.msra.mxu0 0
        %780 = vmatprep.subr.bf16.mxu0 0
        %781 = vmatpush1.bf16.msra.mxu0 0
        %782 = vmatprep.subr.bf16.mxu0 0
        %783 = vmatpush1.bf16.msra.mxu0 0
        %784 = vmatprep.subr.bf16.mxu0 0
        %785 = vmatpush1.bf16.msra.mxu0 %v730
        %786 = vmatprep.subr.bf16.mxu0 0
        %787 = vmatpush1.bf16.msra.mxu0 %v729
        %788 = vmatprep.subr.bf16.mxu0 0
        %789 = vmatpush1.bf16.msra.mxu0 %v728
        %790 = vmatprep.subr.bf16.mxu0 0
        %791 = vmatpush1.bf16.msra.mxu0 %v727
        %792 = vmatprep.subr.bf16.mxu0 0
        %793 = vmatpush2.bf16.msra.mxu0 0
        %794 = vmatprep.subr.bf16.mxu0 0
        %795 = vmatpush2.bf16.msra.mxu0 0
        %796 = vmatprep.subr.bf16.mxu0 0
        %797 = vmatpush2.bf16.msra.mxu0 0
        %798 = vmatprep.subr.bf16.mxu0 0
        %799 = vmatpush2.bf16.msra.mxu0 0
        %800 = vmatprep.subr.bf16.mxu0 0
        %801 = vmatpush2.bf16.msra.mxu0 0
        %802 = vmatprep.subr.bf16.mxu0 0
        %803 = vmatpush2.bf16.msra.mxu0 0
        %804 = vmatprep.subr.bf16.mxu0 0
        %805 = vmatpush2.bf16.msra.mxu0 0
        %806 = vmatprep.subr.bf16.mxu0 0
        %807 = vmatpush2.bf16.msra.mxu0 0
        %808 = vmatprep.mubr.bf16.mxu0 0
        %809 = vmatmul.mubr.bf16.gmra.mxu0 %v771
        %v810 = vpop.f32.mrf.mxu0
        %v811 = vadd.f32 %v742, %v810
        %v812 = vpop.f32.mrf.mxu0
        %v813 = vpop.f32.mrf.mxu0
        %v814 = vadd.f32 %v747, %v813
        %v815 = vpop.f32.mrf.mxu0
        %816 = vmatprep.mubr.bf16.mxu0 0
        %817 = vmatmul.mubr.bf16.gmra.mxu0 %v774
        %v818 = vpop.f32.mrf.mxu0
        %v819 = vadd.f32 %v752, %v818
        %v820 = vpop.f32.mrf.mxu0
        %v821 = vpop.f32.mrf.mxu0
        %v822 = vadd.f32 %v757, %v821
        %v823 = vpop.f32.mrf.mxu0
        %824 = vdwg.mxu0
        %v825 = vmax.f32 %v811, 0.0
        %v826 = vmax.f32 %v814, 0.0
        %v827 = vmax.f32 %v819, 0.0
        %v828 = vmax.f32 %v822, 0.0
        %v829 = vpack.c.bf16 %v826, %v825
        %v830 = vpack.c.bf16 %v828, %v827
        %v831 = vld [vmem:[%s5] sm:$0xf]
        %v832 = vld [vmem:[%s5 + $0x4] sm:$0xf]
        %v833 = vld [vmem:[%s6] sm:$0xff]
        %v834 = vld [vmem:[%s6 + $0x8] sm:$0xff]
        %836 = vset.pattern.permute.xlu0 0
        %837 = vperm.xlu0 %836, %v833
        %v838 = vpop.permute.xlu0 %837
        %841 = vset.pattern.permute.xlu0 0
        %842 = vperm.xlu0 %841, %v834
        %v843 = vpop.permute.xlu0 %842
        %v847 = vunpack.c.l.b16 %v831
        %v848 = vunpack.c.l.b16 %v832
        %v849 = vpack.c.b16 %v848, %v847
        %v851 = vsel %vm641, %v849, 0
        %853 = vmatprep.subr.bf16.mxu0 0
        %854 = vmatpush1.bf16.msra.mxu0 0
        %855 = vmatprep.subr.bf16.mxu0 0
        %856 = vmatpush1.bf16.msra.mxu0 0
        %857 = vmatprep.subr.bf16.mxu0 0
        %858 = vmatpush1.bf16.msra.mxu0 0
        %859 = vmatprep.subr.bf16.mxu0 0
        %860 = vmatpush1.bf16.msra.mxu0 0
        %861 = vmatprep.subr.bf16.mxu0 0
        %862 = vmatpush1.bf16.msra.mxu0 0
        %863 = vmatprep.subr.bf16.mxu0 0
        %864 = vmatpush1.bf16.msra.mxu0 0
        %865 = vmatprep.subr.bf16.mxu0 0
        %866 = vmatpush1.bf16.msra.mxu0 %v830
        %867 = vmatprep.subr.bf16.mxu0 0
        %868 = vmatpush1.bf16.msra.mxu0 %v829
        %869 = vmatprep.subr.bf16.mxu0 0
        %870 = vmatpush2.bf16.msra.mxu0 0
        %871 = vmatprep.subr.bf16.mxu0 0
        %872 = vmatpush2.bf16.msra.mxu0 0
        %873 = vmatprep.subr.bf16.mxu0 0
        %874 = vmatpush2.bf16.msra.mxu0 0
        %875 = vmatprep.subr.bf16.mxu0 0
        %876 = vmatpush2.bf16.msra.mxu0 0
        %877 = vmatprep.subr.bf16.mxu0 0
        %878 = vmatpush2.bf16.msra.mxu0 0
        %879 = vmatprep.subr.bf16.mxu0 0
        %880 = vmatpush2.bf16.msra.mxu0 0
        %881 = vmatprep.subr.bf16.mxu0 0
        %882 = vmatpush2.bf16.msra.mxu0 0
        %883 = vmatprep.subr.bf16.mxu0 0
        %884 = vmatpush2.bf16.msra.mxu0 0
        %885 = vmatprep.mubr.bf16.mxu0 0
        %886 = vmatmul.mubr.bf16.gmra.mxu0 %v851
        %v887 = vpop.f32.mrf.mxu0
        %v888 = vadd.f32 %v838, %v887
        %v889 = vpop.f32.mrf.mxu0
        %v890 = vpop.f32.mrf.mxu0
        %v891 = vadd.f32 %v843, %v890
        %v892 = vpop.f32.mrf.mxu0
        %893 = vdwg.mxu0
        %v894 = vmax.f32 %v888, 0.0
        %v895 = vmax.f32 %v891, 0.0
        %v896 = vpack.c.bf16 %v895, %v894
        %v897 = vld [vmem:[%s7] sm:$0xf]
        %v898 = vld [vmem:[%s7 + $0x4] sm:$0xf]
        %v899 = vld [vmem:[%s8] sm:$0xff]
        %v900 = vld [vmem:[%s8 + $0x8] sm:$0xff]
        %902 = vset.pattern.permute.xlu0 0
        %903 = vperm.xlu0 %902, %v899
        %v904 = vpop.permute.xlu0 %903
        %907 = vset.pattern.permute.xlu0 0
        %908 = vperm.xlu0 %907, %v900
        %v909 = vpop.permute.xlu0 %908
        %v913 = vunpack.c.l.b16 %v897
        %v914 = vunpack.c.l.b16 %v898
        %v915 = vpack.c.b16 %v914, %v913
        %vm916 = vcmask 130048
        %v918 = vsel %vm916, %v915, 0
        %920 = vmatprep.subr.bf16.mxu0 0
        %921 = vmatpush1.bf16.msra.mxu0 0
        %922 = vmatprep.subr.bf16.mxu0 0
        %923 = vmatpush1.bf16.msra.mxu0 0
        %924 = vmatprep.subr.bf16.mxu0 0
        %925 = vmatpush1.bf16.msra.mxu0 0
        %926 = vmatprep.subr.bf16.mxu0 0
        %927 = vmatpush1.bf16.msra.mxu0 0
        %928 = vmatprep.subr.bf16.mxu0 0
        %929 = vmatpush1.bf16.msra.mxu0 0
        %930 = vmatprep.subr.bf16.mxu0 0
        %931 = vmatpush1.bf16.msra.mxu0 0
        %932 = vmatprep.subr.bf16.mxu0 0
        %933 = vmatpush1.bf16.msra.mxu0 0
        %934 = vmatprep.subr.bf16.mxu0 0
        %935 = vmatpush1.bf16.msra.mxu0 %v896
        %936 = vmatprep.subr.bf16.mxu0 0
        %937 = vmatpush2.bf16.msra.mxu0 0
        %938 = vmatprep.subr.bf16.mxu0 0
        %939 = vmatpush2.bf16.msra.mxu0 0
        %940 = vmatprep.subr.bf16.mxu0 0
        %941 = vmatpush2.bf16.msra.mxu0 0
        %942 = vmatprep.subr.bf16.mxu0 0
        %943 = vmatpush2.bf16.msra.mxu0 0
        %944 = vmatprep.subr.bf16.mxu0 0
        %945 = vmatpush2.bf16.msra.mxu0 0
        %946 = vmatprep.subr.bf16.mxu0 0
        %947 = vmatpush2.bf16.msra.mxu0 0
        %948 = vmatprep.subr.bf16.mxu0 0
        %949 = vmatpush2.bf16.msra.mxu0 0
        %950 = vmatprep.subr.bf16.mxu0 0
        %951 = vmatpush2.bf16.msra.mxu0 0
        %952 = vmatprep.mubr.bf16.mxu0 0
        %953 = vmatmul.mubr.bf16.gmra.mxu0 %v918
        %v954 = vpop.f32.mrf.mxu0
        %v955 = vadd.f32 %v904, %v954
        %v956 = vpop.f32.mrf.mxu0
        %v957 = vpop.f32.mrf.mxu0
        %v958 = vadd.f32 %v909, %v957
        %v959 = vpop.f32.mrf.mxu0
        %960 = vdwg.mxu0
        %v961 = vmax.f32 %v955, 0.0
        %v962 = vmax.f32 %v958, 0.0
        %v963 = vpack.c.bf16 %v962, %v961
        %v964 = vld [vmem:[%s9] sm:$0xf]
        %v965 = vld [vmem:[%s9 + $0x4] sm:$0xf]
        %v966 = vld [vmem:[%s9 + $0x8] sm:$0xf]
        %v967 = vld [vmem:[%s9 + $0xc] sm:$0xf]
        %v968 = vld [vmem:[%s10] sm:$0xff]
        %v969 = vld [vmem:[%s10 + $0x8] sm:$0xff]
        %v970 = vld [vmem:[%s10 + $0x10] sm:$0xff]
        %v971 = vld [vmem:[%s10 + $0x18] sm:$0xff]
        %973 = vset.pattern.permute.xlu0 0
        %974 = vperm.xlu0 %973, %v968
        %v975 = vpop.permute.xlu0 %974
        %978 = vset.pattern.permute.xlu0 0
        %979 = vperm.xlu0 %978, %v969
        %v980 = vpop.permute.xlu0 %979
        %983 = vset.pattern.permute.xlu0 0
        %984 = vperm.xlu0 %983, %v970
        %v985 = vpop.permute.xlu0 %984
        %988 = vset.pattern.permute.xlu0 0
        %989 = vperm.xlu0 %988, %v971
        %v990 = vpop.permute.xlu0 %989
        %v996 = vunpack.c.l.b16 %v964
        %v997 = vunpack.c.l.b16 %v965
        %v998 = vunpack.c.l.b16 %v966
        %v999 = vunpack.c.l.b16 %v967
        %v1000 = vpack.c.b16 %v997, %v996
        %v1001 = vpack.c.b16 %v999, %v998
        %v1003 = vsel %vm916, %v1000, 0
        %v1006 = vsel %vm916, %v1001, 0
        %1008 = vmatprep.subr.bf16.mxu0 0
        %1009 = vmatpush1.bf16.msra.mxu0 0
        %1010 = vmatprep.subr.bf16.mxu0 0
        %1011 = vmatpush1.bf16.msra.mxu0 0
        %1012 = vmatprep.subr.bf16.mxu0 0
        %1013 = vmatpush1.bf16.msra.mxu0 0
        %1014 = vmatprep.subr.bf16.mxu0 0
        %1015 = vmatpush1.bf16.msra.mxu0 0
        %1016 = vmatprep.subr.bf16.mxu0 0
        %1017 = vmatpush1.bf16.msra.mxu0 0
        %1018 = vmatprep.subr.bf16.mxu0 0
        %1019 = vmatpush1.bf16.msra.mxu0 0
        %1020 = vmatprep.subr.bf16.mxu0 0
        %1021 = vmatpush1.bf16.msra.mxu0 0
        %1022 = vmatprep.subr.bf16.mxu0 0
        %1023 = vmatpush1.bf16.msra.mxu0 %v963
        %1024 = vmatprep.subr.bf16.mxu0 0
        %1025 = vmatpush2.bf16.msra.mxu0 0
        %1026 = vmatprep.subr.bf16.mxu0 0
        %1027 = vmatpush2.bf16.msra.mxu0 0
        %1028 = vmatprep.subr.bf16.mxu0 0
        %1029 = vmatpush2.bf16.msra.mxu0 0
        %1030 = vmatprep.subr.bf16.mxu0 0
        %1031 = vmatpush2.bf16.msra.mxu0 0
        %1032 = vmatprep.subr.bf16.mxu0 0
        %1033 = vmatpush2.bf16.msra.mxu0 0
        %1034 = vmatprep.subr.bf16.mxu0 0
        %1035 = vmatpush2.bf16.msra.mxu0 0
        %1036 = vmatprep.subr.bf16.mxu0 0
        %1037 = vmatpush2.bf16.msra.mxu0 0
        %1038 = vmatprep.subr.bf16.mxu0 0
        %1039 = vmatpush2.bf16.msra.mxu0 0
        %1040 = vmatprep.mubr.bf16.mxu0 0
        %1041 = vmatmul.mubr.bf16.gmra.mxu0 %v1003
        %v1042 = vpop.f32.mrf.mxu0
        %v1043 = vadd.f32 %v975, %v1042
        %v1044 = vpop.f32.mrf.mxu0
        %v1045 = vpop.f32.mrf.mxu0
        %v1046 = vadd.f32 %v980, %v1045
        %v1047 = vpop.f32.mrf.mxu0
        %1048 = vmatprep.mubr.bf16.mxu0 0
        %1049 = vmatmul.mubr.bf16.gmra.mxu0 %v1006
        %v1050 = vpop.f32.mrf.mxu0
        %v1051 = vadd.f32 %v985, %v1050
        %v1052 = vpop.f32.mrf.mxu0
        %v1053 = vpop.f32.mrf.mxu0
        %v1054 = vadd.f32 %v990, %v1053
        %v1055 = vpop.f32.mrf.mxu0
        %1056 = vdwg.mxu0
        %v1057 = vmax.f32 %v1043, 0.0
        %v1058 = vmax.f32 %v1046, 0.0
        %v1059 = vmax.f32 %v1051, 0.0
        %v1060 = vmax.f32 %v1054, 0.0
        %v1061 = vpack.c.bf16 %v1058, %v1057
        %v1062 = vpack.c.bf16 %v1060, %v1059
        %v1063 = vld [vmem:[%s11] sm:$0xf]
        %v1064 = vld [vmem:[%s11 + $0x4] sm:$0xf]
        %v1065 = vld [vmem:[%s11 + $0x8] sm:$0xf]
        %v1066 = vld [vmem:[%s11 + $0xc] sm:$0xf]
        %v1067 = vld [vmem:[%s11 + $0x10] sm:$0xf]
        %v1068 = vld [vmem:[%s11 + $0x14] sm:$0xf]
        %v1069 = vld [vmem:[%s11 + $0x18] sm:$0xf]
        %v1070 = vld [vmem:[%s11 + $0x1c] sm:$0xf]
        %v1071 = vld [vmem:[%s12] sm:$0xff]
        %v1072 = vld [vmem:[%s12 + $0x8] sm:$0xff]
        %v1073 = vld [vmem:[%s12 + $0x10] sm:$0xff]
        %v1074 = vld [vmem:[%s12 + $0x18] sm:$0xff]
        %v1075 = vld [vmem:[%s12 + $0x20] sm:$0xff]
        %v1076 = vld [vmem:[%s12 + $0x28] sm:$0xff]
        %v1077 = vld [vmem:[%s12 + $0x30] sm:$0xff]
        %v1078 = vld [vmem:[%s12 + $0x38] sm:$0xff]
        %1080 = vset.pattern.permute.xlu0 0
        %1081 = vperm.xlu0 %1080, %v1071
        %v1082 = vpop.permute.xlu0 %1081
        %1085 = vset.pattern.permute.xlu0 0
        %1086 = vperm.xlu0 %1085, %v1072
        %v1087 = vpop.permute.xlu0 %1086
        %1090 = vset.pattern.permute.xlu0 0
        %1091 = vperm.xlu0 %1090, %v1073
        %v1092 = vpop.permute.xlu0 %1091
        %1095 = vset.pattern.permute.xlu0 0
        %1096 = vperm.xlu0 %1095, %v1074
        %v1097 = vpop.permute.xlu0 %1096
        %1100 = vset.pattern.permute.xlu0 0
        %1101 = vperm.xlu0 %1100, %v1075
        %v1102 = vpop.permute.xlu0 %1101
        %1105 = vset.pattern.permute.xlu0 0
        %1106 = vperm.xlu0 %1105, %v1076
        %v1107 = vpop.permute.xlu0 %1106
        %1110 = vset.pattern.permute.xlu0 0
        %1111 = vperm.xlu0 %1110, %v1077
        %v1112 = vpop.permute.xlu0 %1111
        %1115 = vset.pattern.permute.xlu0 0
        %1116 = vperm.xlu0 %1115, %v1078
        %v1117 = vpop.permute.xlu0 %1116
        %v1127 = vunpack.c.l.b16 %v1063
        %v1128 = vunpack.c.l.b16 %v1064
        %v1129 = vunpack.c.l.b16 %v1065
        %v1130 = vunpack.c.l.b16 %v1066
        %v1131 = vunpack.c.l.b16 %v1067
        %v1132 = vunpack.c.l.b16 %v1068
        %v1133 = vunpack.c.l.b16 %v1069
        %v1134 = vunpack.c.l.b16 %v1070
        %v1135 = vpack.c.b16 %v1128, %v1127
        %v1136 = vpack.c.b16 %v1130, %v1129
        %v1137 = vpack.c.b16 %v1132, %v1131
        %v1138 = vpack.c.b16 %v1134, %v1133
        %v1140 = vsel %vm641, %v1135, 0
        %v1143 = vsel %vm641, %v1136, 0
        %v1146 = vsel %vm641, %v1137, 0
        %v1149 = vsel %vm641, %v1138, 0
        %1151 = vmatprep.subr.bf16.mxu0 0
        %1152 = vmatpush1.bf16.msra.mxu0 0
        %1153 = vmatprep.subr.bf16.mxu0 0
        %1154 = vmatpush1.bf16.msra.mxu0 0
        %1155 = vmatprep.subr.bf16.mxu0 0
        %1156 = vmatpush1.bf16.msra.mxu0 0
        %1157 = vmatprep.subr.bf16.mxu0 0
        %1158 = vmatpush1.bf16.msra.mxu0 0
        %1159 = vmatprep.subr.bf16.mxu0 0
        %1160 = vmatpush1.bf16.msra.mxu0 0
        %1161 = vmatprep.subr.bf16.mxu0 0
        %1162 = vmatpush1.bf16.msra.mxu0 0
        %1163 = vmatprep.subr.bf16.mxu0 0
        %1164 = vmatpush1.bf16.msra.mxu0 %v1062
        %1165 = vmatprep.subr.bf16.mxu0 0
        %1166 = vmatpush1.bf16.msra.mxu0 %v1061
        %1167 = vmatprep.subr.bf16.mxu0 0
        %1168 = vmatpush2.bf16.msra.mxu0 0
        %1169 = vmatprep.subr.bf16.mxu0 0
        %1170 = vmatpush2.bf16.msra.mxu0 0
        %1171 = vmatprep.subr.bf16.mxu0 0
        %1172 = vmatpush2.bf16.msra.mxu0 0
        %1173 = vmatprep.subr.bf16.mxu0 0
        %1174 = vmatpush2.bf16.msra.mxu0 0
        %1175 = vmatprep.subr.bf16.mxu0 0
        %1176 = vmatpush2.bf16.msra.mxu0 0
        %1177 = vmatprep.subr.bf16.mxu0 0
        %1178 = vmatpush2.bf16.msra.mxu0 0
        %1179 = vmatprep.subr.bf16.mxu0 0
        %1180 = vmatpush2.bf16.msra.mxu0 0
        %1181 = vmatprep.subr.bf16.mxu0 0
        %1182 = vmatpush2.bf16.msra.mxu0 0
        %1183 = vmatprep.mubr.bf16.mxu0 0
        %1184 = vmatmul.mubr.bf16.gmra.mxu0 %v1140
        %v1185 = vpop.f32.mrf.mxu0
        %v1186 = vadd.f32 %v1082, %v1185
        %v1187 = vpop.f32.mrf.mxu0
        %v1188 = vpop.f32.mrf.mxu0
        %v1189 = vadd.f32 %v1087, %v1188
        %v1190 = vpop.f32.mrf.mxu0
        %1191 = vmatprep.mubr.bf16.mxu0 0
        %1192 = vmatmul.mubr.bf16.gmra.mxu0 %v1143
        %v1193 = vpop.f32.mrf.mxu0
        %v1194 = vadd.f32 %v1092, %v1193
        %v1195 = vpop.f32.mrf.mxu0
        %v1196 = vpop.f32.mrf.mxu0
        %v1197 = vadd.f32 %v1097, %v1196
        %v1198 = vpop.f32.mrf.mxu0
        %1199 = vmatprep.mubr.bf16.mxu0 0
        %1200 = vmatmul.mubr.bf16.gmra.mxu0 %v1146
        %v1201 = vpop.f32.mrf.mxu0
        %v1202 = vadd.f32 %v1102, %v1201
        %v1203 = vpop.f32.mrf.mxu0
        %v1204 = vpop.f32.mrf.mxu0
        %v1205 = vadd.f32 %v1107, %v1204
        %v1206 = vpop.f32.mrf.mxu0
        %1207 = vmatprep.mubr.bf16.mxu0 0
        %1208 = vmatmul.mubr.bf16.gmra.mxu0 %v1149
        %v1209 = vpop.f32.mrf.mxu0
        %v1210 = vadd.f32 %v1112, %v1209
        %v1211 = vpop.f32.mrf.mxu0
        %v1212 = vpop.f32.mrf.mxu0
        %v1213 = vadd.f32 %v1117, %v1212
        %v1214 = vpop.f32.mrf.mxu0
        %1215 = vdwg.mxu0
        %v1216 = vmax.f32 %v1186, 0.0
        %v1217 = vmax.f32 %v1189, 0.0
        %v1218 = vmax.f32 %v1194, 0.0
        %v1219 = vmax.f32 %v1197, 0.0
        %v1220 = vmax.f32 %v1202, 0.0
        %v1221 = vmax.f32 %v1205, 0.0
        %v1222 = vmax.f32 %v1210, 0.0
        %v1223 = vmax.f32 %v1213, 0.0
        %v1224 = vpack.c.bf16 %v1217, %v1216
        %v1225 = vpack.c.bf16 %v1219, %v1218
        %v1226 = vpack.c.bf16 %v1221, %v1220
        %v1227 = vpack.c.bf16 %v1223, %v1222
        %v1228 = vld [vmem:[%s13] sm:$0xf]
        %v1229 = vld [vmem:[%s13 + $0x4] sm:$0xf]
        %v1230 = vld [vmem:[%s13 + $0x8] sm:$0xf]
        %v1231 = vld [vmem:[%s13 + $0xc] sm:$0xf]
        %v1232 = vld [vmem:[%s14] sm:$0xff]
        %v1233 = vld [vmem:[%s14 + $0x8] sm:$0xff]
        %v1234 = vld [vmem:[%s14 + $0x10] sm:$0xff]
        %v1235 = vld [vmem:[%s14 + $0x18] sm:$0xff]
        %1237 = vset.pattern.permute.xlu0 0
        %1238 = vperm.xlu0 %1237, %v1232
        %v1239 = vpop.permute.xlu0 %1238
        %1242 = vset.pattern.permute.xlu0 0
        %1243 = vperm.xlu0 %1242, %v1233
        %v1244 = vpop.permute.xlu0 %1243
        %1247 = vset.pattern.permute.xlu0 0
        %1248 = vperm.xlu0 %1247, %v1234
        %v1249 = vpop.permute.xlu0 %1248
        %1252 = vset.pattern.permute.xlu0 0
        %1253 = vperm.xlu0 %1252, %v1235
        %v1254 = vpop.permute.xlu0 %1253
        %v1260 = vunpack.c.l.b16 %v1228
        %v1261 = vunpack.c.l.b16 %v1229
        %v1262 = vunpack.c.l.b16 %v1230
        %v1263 = vunpack.c.l.b16 %v1231
        %v1264 = vpack.c.b16 %v1261, %v1260
        %v1265 = vpack.c.b16 %v1263, %v1262
        %v1267 = vsel %vm769, %v1264, 0
        %v1270 = vsel %vm769, %v1265, 0
        %1272 = vmatprep.subr.bf16.mxu0 0
        %1273 = vmatpush1.bf16.msra.mxu0 0
        %1274 = vmatprep.subr.bf16.mxu0 0
        %1275 = vmatpush1.bf16.msra.mxu0 0
        %1276 = vmatprep.subr.bf16.mxu0 0
        %1277 = vmatpush1.bf16.msra.mxu0 0
        %1278 = vmatprep.subr.bf16.mxu0 0
        %1279 = vmatpush1.bf16.msra.mxu0 0
        %1280 = vmatprep.subr.bf16.mxu0 0
        %1281 = vmatpush1.bf16.msra.mxu0 %v1227
        %1282 = vmatprep.subr.bf16.mxu0 0
        %1283 = vmatpush1.bf16.msra.mxu0 %v1226
        %1284 = vmatprep.subr.bf16.mxu0 0
        %1285 = vmatpush1.bf16.msra.mxu0 %v1225
        %1286 = vmatprep.subr.bf16.mxu0 0
        %1287 = vmatpush1.bf16.msra.mxu0 %v1224
        %1288 = vmatprep.subr.bf16.mxu0 0
        %1289 = vmatpush2.bf16.msra.mxu0 0
        %1290 = vmatprep.subr.bf16.mxu0 0
        %1291 = vmatpush2.bf16.msra.mxu0 0
        %1292 = vmatprep.subr.bf16.mxu0 0
        %1293 = vmatpush2.bf16.msra.mxu0 0
        %1294 = vmatprep.subr.bf16.mxu0 0
        %1295 = vmatpush2.bf16.msra.mxu0 0
        %1296 = vmatprep.subr.bf16.mxu0 0
        %1297 = vmatpush2.bf16.msra.mxu0 0
        %1298 = vmatprep.subr.bf16.mxu0 0
        %1299 = vmatpush2.bf16.msra.mxu0 0
        %1300 = vmatprep.subr.bf16.mxu0 0
        %1301 = vmatpush2.bf16.msra.mxu0 0
        %1302 = vmatprep.subr.bf16.mxu0 0
        %1303 = vmatpush2.bf16.msra.mxu0 0
        %1304 = vmatprep.mubr.bf16.mxu0 0
        %1305 = vmatmul.mubr.bf16.gmra.mxu0 %v1267
        %v1306 = vpop.f32.mrf.mxu0
        %v1307 = vadd.f32 %v1239, %v1306
        %v1308 = vpop.f32.mrf.mxu0
        %v1309 = vpop.f32.mrf.mxu0
        %v1310 = vadd.f32 %v1244, %v1309
        %v1311 = vpop.f32.mrf.mxu0
        %1312 = vmatprep.mubr.bf16.mxu0 0
        %1313 = vmatmul.mubr.bf16.gmra.mxu0 %v1270
        %v1314 = vpop.f32.mrf.mxu0
        %v1315 = vadd.f32 %v1249, %v1314
        %v1316 = vpop.f32.mrf.mxu0
        %v1317 = vpop.f32.mrf.mxu0
        %v1318 = vadd.f32 %v1254, %v1317
        %v1319 = vpop.f32.mrf.mxu0
        %1320 = vdwg.mxu0
        %1321 = vst [vmem:[%s547] sm:$0xff] %v1307
        %1322 = vst [vmem:[%s547 + $0x8] sm:$0xff] %v1310
        %1323 = vst [vmem:[%s547 + $0x10] sm:$0xff] %v1315
        %1324 = vst [vmem:[%s547 + $0x18] sm:$0xff] %v1318
        %s1325 = sand.u32 %s357, 1
        %s1326 = scalar_lea.sflag [#allocation4], %s1325
        %s1327 = sand.u32 %s357, 1
        %s1328 = smul.addr %s1327, 32
        %s1329 = scalar_lea.vmem [#allocation3], %s1328
        // Predicated region
        $region122: #{tpu_custom_call.1} parent=116 // pred_check
          %p1330 = pneg %p367
        $region123: #{tpu_custom_call.1} parent=116 // pred_check_branch
          %1332 = sbr.rel (%p1330) target = $region125
        $region124: #{tpu_custom_call.1} parent=116 // pred_region
          %s1334 = ssub.s32 512, 512
          %1335 = vsyncadd %s1326, %s1334
          %s1336 = smul.addr %s29, 128
          %s1337 = scalar_lea.hbm %s15, %s1336
          %s1338 = sshll.u32 %s1329, 4
          %s1339 = int_to_ptr.vmem [resolvable:$true] %s1338
          %1344 = dma.vmem_to_hbm [thread:$0]  %s1339, 512, %s1337, %s1326, 128, 256, 8
        $region125: #{tpu_custom_call.1} parent=116 // pred_fallthru
          _
      $region117: #{tpu_custom_call.1} parent=5 // pred_fallthru
        _
      %p1345 = scmp.le.s32.totalorder 2, %s24
      // Predicated region
      $region126: #{tpu_custom_call.1} parent=5 // pred_check
        %p1346 = pneg %p1345
      $region127: #{tpu_custom_call.1} parent=5 // pred_check_branch
        %1348 = sbr.rel (%p1346) target = $region129
      $region128: #{tpu_custom_call.1} parent=5 // pred_region
        %s1349 = ssub.s32 %s24, 2
        // Predicated region
        $region130: #{tpu_custom_call.1} parent=128 // pred_check
          %p1350 = pneg %p373
        $region131: #{tpu_custom_call.1} parent=128 // pred_check_branch
          %1352 = sbr.rel (%p1350) target = $region133
        $region132: #{tpu_custom_call.1} parent=128 // pred_region
          %s1353 = sand.u32 %s358, 1
          %s1354 = scalar_lea.sflag [#allocation4], %s1353
          %s1355 = sand.u32 %s358, 1
          %s1356 = smul.addr %s1355, 32
          %s1357 = scalar_lea.vmem [#allocation3], %s1356
          %1358 = dma.done %s1354, 512
        $region133: #{tpu_custom_call.1} parent=128 // pred_fallthru
          _
      $region129: #{tpu_custom_call.1} parent=5 // pred_fallthru
        _
    $region6: #{tpu_custom_call.1} parent=1 // loop_footer
      %s28 = sadd.s32 1, %s24
    $region7: #{tpu_custom_call.1} parent=1 // loop_footer_branch
      %23 = sbr.rel target = $region3
    $region8: #{tpu_custom_call.1} parent=1 // loop_exit
      _
    %1359 = vsyncpa [#allocation4], 1
    %s1360 = scalar_lea.sflag [#allocation4], 1
    %1361 = vsyncpa %s1360, 1

</llo_original>
